<compile_context>
chip_gen: v6e
topology: v6e:2x2x1
jax: 0.10.0
libtpu: 0.0.40
codegen_flags: <defaults>
</compile_context>

<pallas_src>
import math

import jax
import jax.numpy as jnp
from jax.experimental import pallas as pl
from jax.experimental.pallas import tpu as pltpu

EPS = 1e-5  # nn.InstanceNorm2d default


def _round_up(x, m):
    return ((x + m - 1) // m) * m


def resnet_block(x_nchw, w_hwio, b, *, tile_h=32, compute_dtype=jnp.bfloat16):
    """x_nchw: (N, C, H, W); w_hwio: (3, 3, Cin, Cout); b: (Cout,)."""
    N, C, H, W = x_nchw.shape
    assert H % 8 == 0 and H >= 8, "H must be a multiple of 8"
    assert W >= 2 and H >= 2, "reflection pad of 1 needs spatial dims >= 2"

    # Row tile: largest multiple of 8 that divides H and is <= tile_h.
    TH = 8
    for cand in range(8, min(tile_h, H) + 1, 8):
        if H % cand == 0:
            TH = cand
    R = H // TH                               # row tiles per sample

    # Lane layout: pad width so TH*Wp % 128 == 0 with minimal junk columns.
    align = 128 // math.gcd(TH, 128)
    Wc = W + 2                                # width after reflection pad
    Wp = _round_up(Wc, align)
    THp = TH * Wp                             # flattened row-tile width (dot lane dim)
    HWp = H * Wp
    assert THp % 128 == 0
    Lh = (TH + 2) * Wp                        # halo rows per tile, flattened
    Lh_pad = _round_up(Lh + 2, 128)           # +2 so the dy=2,dx=2 tap slice is in-bounds
    # Flattened HBM activation is zero-tail-padded so every halo DMA window is
    # fully in-bounds and contains only finite data (no NaN poisoning of stats).
    Lx = max((H + 2) * Wp, (R - 1) * THp + Lh_pad)

    # ---- wrapper glue (plain XLA): reflection pad once, flatten; no slab copies ----
    xpad = jnp.pad(x_nchw, ((0, 0), (0, 0), (1, 1), (1, 1)), mode="reflect")
    xpad = jnp.pad(xpad, ((0, 0), (0, 0), (0, 0), (0, Wp - Wc)))            # (N,C,H+2,Wp)
    x_flat = xpad.astype(compute_dtype).reshape(N, C, (H + 2) * Wp)
    x_flat = jnp.pad(x_flat, ((0, 0), (0, 0), (0, Lx - (H + 2) * Wp)))      # (N,C,Lx)

    # (kh, kw, cin, cout) -> per-tap (cout, cin), bf16 for the MXU
    w9 = jnp.transpose(w_hwio, (0, 1, 3, 2)).reshape(9, C, C).astype(compute_dtype)
    b2 = b.reshape(C, 1).astype(jnp.float32)
    # valid-column mask: flattened column t is a real output pixel iff (t % Wp) < W
    mask = ((jnp.arange(THp) % Wp) < W).astype(jnp.float32).reshape(1, THp)

    inv_count = 1.0 / float(H * W)
    out_dtype = x_nchw.dtype

    def kernel(x_hbm, w_ref, b_ref, m_ref, out_ref,
               halo_ref, dma_sem, conv_ref, res_ref, s_ref, ss_ref):
        n = pl.program_id(0)
        p = pl.program_id(1)   # phase 0: conv + stats, phase 1: normalize + residual
        r = pl.program_id(2)   # row-tile index

        def halo_copy(row_tile, slot):
            start = pl.multiple_of(row_tile * THp, 128)
            return pltpu.make_async_copy(
                x_hbm.at[n, :, pl.ds(start, Lh_pad)],
                halo_ref.at[slot],
                dma_sem.at[slot])

        @pl.when(jnp.logical_and(p == 0, r == 0))
        def _init():
            s_ref[...] = jnp.zeros_like(s_ref)
            ss_ref[...] = jnp.zeros_like(ss_ref)
            halo_copy(r, 0).start()                       # prime tile 0 into slot 0

        @pl.when(p == 0)
        def _accumulate():
            slot = r % 2
            halo_copy(r, slot).wait()                     # wait current tile's halo

            @pl.when(r + 1 < R)
            def _prefetch():
                halo_copy(r + 1, 1 - slot).start()        # overlap next tile's DMA

            hv = halo_ref[slot]                           # (C, Lh_pad) bf16
            acc = jnp.zeros((C, THp), dtype=jnp.float32)
            for dy in range(3):
                for dx in range(3):
                    s0 = dy * Wp + dx
                    # combined row/col shift = one lane-offset slice of the halo;
                    # any spill only lands in junk (masked / sliced-off) columns.
                    xsh = hv[:, s0:s0 + THp]
                    acc = acc + jnp.dot(w_ref[3 * dy + dx], xsh,
                                        preferred_element_type=jnp.float32)
            acc = acc + b_ref[...]                        # bias in f32
            conv_ref[r] = acc
            # residual window is already inside the halo: xpad rows r*TH+1.., col 1..
            res_ref[r] = hv[:, Wp + 1:Wp + 1 + THp]
            masked = acc * m_ref[...]                     # zero out junk columns
            s_ref[...] += jnp.sum(masked, axis=1, keepdims=True)
            ss_ref[...] += jnp.sum(masked * acc, axis=1, keepdims=True)

        @pl.when(p == 1)
        def _finalize():
            mean = s_ref[...] * inv_count
            var = ss_ref[...] * inv_count - mean * mean
            inv = jax.lax.rsqrt(var + EPS)
            conv = conv_ref[r]
            resid = res_ref[r].astype(jnp.float32)
            out_ref[0] = (resid + (conv - mean) * inv).astype(out_dtype)

    cdt_size = jnp.dtype(compute_dtype).itemsize
    cost = pl.CostEstimate(
        flops=2 * N * 9 * C * C * H * Wp,
        transcendentals=N * C,
        bytes_accessed=(N * C * R * Lh_pad * cdt_size       # halo DMAs
                        + 9 * C * C * cdt_size               # weights
                        + N * C * HWp * jnp.dtype(out_dtype).itemsize),  # output
    )

    out_flat = pl.pallas_call(
        kernel,
        out_shape=jax.ShapeDtypeStruct((N, C, HWp), out_dtype),
        grid_spec=pltpu.PrefetchScalarGridSpec(
            num_scalar_prefetch=0,
            grid=(N, 2, R),
            in_specs=[
                pl.BlockSpec(memory_space=pl.ANY),               # activation stays in HBM
                pl.BlockSpec((9, C, C), lambda n, p, r: (0, 0, 0)),
                pl.BlockSpec((C, 1), lambda n, p, r: (0, 0)),
                pl.BlockSpec((1, THp), lambda n, p, r: (0, 0)),
            ],
            out_specs=pl.BlockSpec((1, C, THp), lambda n, p, r: (n, 0, r * p)),
            scratch_shapes=[
                pltpu.VMEM((2, C, Lh_pad), compute_dtype),       # halo double buffer
                pltpu.SemaphoreType.DMA((2,)),                   # halo DMA sems
                pltpu.VMEM((R, C, THp), jnp.float32),            # per-sample conv tiles
                pltpu.VMEM((R, C, THp), compute_dtype),          # residual stash (bf16)
                pltpu.VMEM((C, 1), jnp.float32),                 # per-channel sum
                pltpu.VMEM((C, 1), jnp.float32),                 # per-channel sum of sq
            ],
        ),
        compiler_params=pltpu.CompilerParams(
            dimension_semantics=("parallel", "arbitrary", "arbitrary"),
            vmem_limit_bytes=40 * 1024 * 1024,                   # v7x-safe (<64 MiB)
        ),
        cost_estimate=cost,
    )(x_flat, w9, b2, mask)

    out = out_flat.reshape(N, C, H, Wp)[:, :, :, :W]
    return out


def resnet_block_reference(x_nchw, w_hwio, b, *, compute_dtype=jnp.float32,
                           residual_dtype=jnp.float32):
    """Pure-JAX reference; compute_dtype / residual_dtype control operand precision."""
    x = jnp.transpose(x_nchw, (0, 2, 3, 1)).astype(jnp.float32)            # NHWC
    xpad = jnp.pad(x, ((0, 0), (1, 1), (1, 1), (0, 0)), mode="reflect")
    conv = jax.lax.conv_general_dilated(
        xpad.astype(compute_dtype), w_hwio.astype(compute_dtype),
        window_strides=(1, 1), padding="VALID",
        dimension_numbers=("NHWC", "HWIO", "NHWC"),
        preferred_element_type=jnp.float32)
    conv = conv + b.astype(jnp.float32)
    mean = jnp.mean(conv, axis=(1, 2), keepdims=True)
    var = jnp.mean(jnp.square(conv - mean), axis=(1, 2), keepdims=True)
    normed = (conv - mean) * jax.lax.rsqrt(var + EPS)
    resid = x.astype(residual_dtype).astype(jnp.float32)
    out = resid + normed
    return jnp.transpose(out, (0, 3, 1, 2)).astype(x_nchw.dtype)


if __name__ == "__main__":
    key = jax.random.PRNGKey(0)
    k_x, k_w, k_b = jax.random.split(key, 3)

    N, C, H, W = 2, 4, 16, 16                                    # dim = C = 4
    x = jax.random.normal(k_x, (N, C, H, W), jnp.float32)
    # Conv2d(dim, dim, 3, bias=True) parameters, deterministic synthetic init.
    w = jax.random.normal(k_w, (3, 3, C, C), jnp.float32) * 0.1  # (kh, kw, cin, cout)
    b = jax.random.normal(k_b, (C,), jnp.float32) * 0.1

    out = jax.block_until_ready(resnet_block(x, w, b))
    assert out.shape == (N, C, H, W)

    # Tight check vs a reference using the same bf16 operand precision (conv + residual).
    ref_bf16 = resnet_block_reference(x, w, b, compute_dtype=jnp.bfloat16,
                                      residual_dtype=jnp.bfloat16)
    assert jnp.allclose(out, ref_bf16, atol=3e-3, rtol=3e-3), \
        "Pallas kernel mismatch vs bf16-consistent reference"
    # Sanity check vs the exact f32 reference (looser: bf16 MXU inputs / bf16 skip).
    ref_f32 = resnet_block_reference(x, w, b)
    assert jnp.allclose(out, ref_f32, atol=1e-1, rtol=1e-1), \
        "Pallas kernel mismatch vs f32 reference"

    print("KERNEL_OK")
</pallas_src>

<mosaic_0001>
module attributes {stable_mosaic.version = 11 : i64} {
  func.func @kernel(%arg0: i32, %arg1: i32, %arg2: i32, %arg3: memref<2x4x512xbf16, #tpu.memory_space<any>>, %arg4: memref<9x4x4xbf16, #tpu.memory_space<vmem>>, %arg5: memref<4x1xf32, #tpu.memory_space<vmem>>, %arg6: memref<1x384xf32, #tpu.memory_space<vmem>>, %arg7: memref<1x4x384xf32, #tpu.memory_space<vmem>>, %arg8: memref<2x4x512xbf16, #tpu.memory_space<vmem>>, %arg9: memref<2x!tpu.dma_semaphore, #tpu.memory_space<semaphore_mem>>, %arg10: memref<1x4x384xf32, #tpu.memory_space<vmem>>, %arg11: memref<1x4x384xbf16, #tpu.memory_space<vmem>>, %arg12: memref<4x1xf32, #tpu.memory_space<vmem>>, %arg13: memref<4x1xf32, #tpu.memory_space<vmem>>) attributes {dimension_semantics = [#tpu.dimension_semantics<parallel>, #tpu.dimension_semantics<arbitrary>, #tpu.dimension_semantics<arbitrary>], iteration_bounds = array<i64: 2, 2, 1>, scalar_prefetch = 0 : i64, scratch_operands = 6 : i64, tpu.core_type = #tpu.core_type<tc>, window_params = [{}, {pipeline_mode = #tpu.pipeline_mode<synchronous>, transform_indices = @transform_1, window_bounds = array<i64: 9, 4, 4>}, {pipeline_mode = #tpu.pipeline_mode<synchronous>, transform_indices = @transform_2, window_bounds = array<i64: 4, 1>}, {pipeline_mode = #tpu.pipeline_mode<synchronous>, transform_indices = @transform_3, window_bounds = array<i64: 1, 384>}, {transform_indices = @transform_4, window_bounds = array<i64: 1, 4, 384>}]} {
    %c0_i32 = arith.constant 0 : i32
    %0 = arith.cmpi eq, %arg1, %c0_i32 : i32
    %c0_i32_0 = arith.constant 0 : i32
    %1 = arith.cmpi eq, %arg2, %c0_i32_0 : i32
    %2 = arith.andi %0, %1 : i1
    %3 = arith.extui %2 : i1 to i32
    %c0_i32_1 = arith.constant 0 : i32
    %4 = arith.cmpi ne, %3, %c0_i32_1 : i32
    scf.if %4 {
      %cst = arith.constant 0.000000e+00 : f32
      %11 = vector.broadcast %cst : f32 to vector<4x1xf32>
      %c0 = arith.constant 0 : index
      %c0_5 = arith.constant 0 : index
      %12 = vector.load %arg12[%c0, %c0_5] : memref<4x1xf32, #tpu.memory_space<vmem>>, vector<4x1xf32>
      tpu.vector_store %arg12[%c0, %c0_5], %11 {strides = array<i32>} : memref<4x1xf32, #tpu.memory_space<vmem>>, vector<4x1xf32>,
      %cst_6 = arith.constant 0.000000e+00 : f32
      %13 = vector.broadcast %cst_6 : f32 to vector<4x1xf32>
      %c0_7 = arith.constant 0 : index
      %c0_8 = arith.constant 0 : index
      %14 = vector.load %arg13[%c0_7, %c0_8] : memref<4x1xf32, #tpu.memory_space<vmem>>, vector<4x1xf32>
      tpu.vector_store %arg13[%c0_7, %c0_8], %13 {strides = array<i32>} : memref<4x1xf32, #tpu.memory_space<vmem>>, vector<4x1xf32>,
      %c384_i32 = arith.constant 384 : i32
      %15 = arith.muli %arg2, %c384_i32 : i32
      %16 = tpu.assume_multiple %15, 128 : i32
      %c0_i32_9 = arith.constant 0 : i32
      %c0_i32_10 = arith.constant 0 : i32
      %c0_i32_11 = arith.constant 0 : i32
      %17 = tpu.memref_slice %arg3[%arg0, %c0_i32_11, %16] : memref<2x4x512xbf16, #tpu.memory_space<any>> -> memref<1x4x512xbf16, #tpu.memory_space<any>>
      %18 = tpu.memref_squeeze %17 : memref<1x4x512xbf16, #tpu.memory_space<any>> -> memref<4x512xbf16, #tpu.memory_space<any>>
      %c0_i32_12 = arith.constant 0 : i32
      %c0_i32_13 = arith.constant 0 : i32
      %19 = tpu.memref_slice %arg8[%c0_i32_9, %c0_i32_12, %c0_i32_13] : memref<2x4x512xbf16, #tpu.memory_space<vmem>> -> memref<1x4x512xbf16, #tpu.memory_space<vmem>>
      %20 = tpu.memref_squeeze %19 : memref<1x4x512xbf16, #tpu.memory_space<vmem>> -> memref<4x512xbf16, #tpu.memory_space<vmem>>
      %21 = tpu.memref_slice %arg9[%c0_i32_10] : memref<2x!tpu.dma_semaphore, #tpu.memory_space<semaphore_mem>> -> memref<1x!tpu.dma_semaphore, #tpu.memory_space<semaphore_mem>>
      %22 = tpu.memref_squeeze %21 : memref<1x!tpu.dma_semaphore, #tpu.memory_space<semaphore_mem>> -> memref<!tpu.dma_semaphore, #tpu.memory_space<semaphore_mem>>
      tpu.enqueue_dma source(%18 : memref<4x512xbf16, #tpu.memory_space<any>>) target(%20 : memref<4x512xbf16, #tpu.memory_space<vmem>>) target_semaphore(%22 : memref<!tpu.dma_semaphore, #tpu.memory_space<semaphore_mem>>)
    } else {
    }
    %c0_i32_2 = arith.constant 0 : i32
    %5 = arith.cmpi eq, %arg1, %c0_i32_2 : i32
    %6 = arith.extui %5 : i1 to i32
    %c0_i32_3 = arith.constant 0 : i32
    %7 = arith.cmpi ne, %6, %c0_i32_3 : i32
    scf.if %7 {
      %c2_i32 = arith.constant 2 : i32
      %c0_i32_5 = arith.constant 0 : i32
      %11 = arith.cmpi eq, %c2_i32, %c0_i32_5 : i32
      %c1_i32_6 = arith.constant 1 : i32
      %12 = arith.select %11, %c1_i32_6, %c2_i32 : i32
      %13 = arith.remsi %arg2, %12 : i32
      %c0_i32_7 = arith.constant 0 : i32
      %14 = arith.cmpi ne, %13, %c0_i32_7 : i32
      %c0_i32_8 = arith.constant 0 : i32
      %15 = arith.cmpi slt, %13, %c0_i32_8 : i32
      %c0_i32_9 = arith.constant 0 : i32
      %16 = arith.cmpi slt, %12, %c0_i32_9 : i32
      %17 = arith.xori %15, %16 : i1
      %18 = arith.andi %17, %14 : i1
      %19 = arith.addi %13, %12 : i32
      %20 = arith.select %18, %19, %13 : i32
      %c384_i32 = arith.constant 384 : i32
      %21 = arith.muli %arg2, %c384_i32 : i32
      %22 = tpu.assume_multiple %21, 128 : i32
      %c0_i32_10 = arith.constant 0 : i32
      %23 = tpu.memref_slice %arg3[%arg0, %c0_i32_10, %22] : memref<2x4x512xbf16, #tpu.memory_space<any>> -> memref<1x4x512xbf16, #tpu.memory_space<any>>
      %24 = tpu.memref_squeeze %23 : memref<1x4x512xbf16, #tpu.memory_space<any>> -> memref<4x512xbf16, #tpu.memory_space<any>>
      %c0_i32_11 = arith.constant 0 : i32
      %c0_i32_12 = arith.constant 0 : i32
      %25 = tpu.memref_slice %arg8[%20, %c0_i32_11, %c0_i32_12] : memref<2x4x512xbf16, #tpu.memory_space<vmem>> -> memref<1x4x512xbf16, #tpu.memory_space<vmem>>
      %26 = tpu.memref_squeeze %25 : memref<1x4x512xbf16, #tpu.memory_space<vmem>> -> memref<4x512xbf16, #tpu.memory_space<vmem>>
      %27 = tpu.memref_slice %arg9[%20] : memref<2x!tpu.dma_semaphore, #tpu.memory_space<semaphore_mem>> -> memref<1x!tpu.dma_semaphore, #tpu.memory_space<semaphore_mem>>
      %28 = tpu.memref_squeeze %27 : memref<1x!tpu.dma_semaphore, #tpu.memory_space<semaphore_mem>> -> memref<!tpu.dma_semaphore, #tpu.memory_space<semaphore_mem>>
      tpu.wait_dma2 semaphore(%28 : memref<!tpu.dma_semaphore, #tpu.memory_space<semaphore_mem>>) src(%24 : memref<4x512xbf16, #tpu.memory_space<any>>) dst(%26 : memref<4x512xbf16, #tpu.memory_space<vmem>>)
      %c1_i32_13 = arith.constant 1 : i32
      %29 = arith.addi %arg2, %c1_i32_13 : i32
      %c1_i32_14 = arith.constant 1 : i32
      %30 = arith.cmpi slt, %29, %c1_i32_14 : i32
      %31 = arith.extui %30 : i1 to i32
      %c0_i32_15 = arith.constant 0 : i32
      %32 = arith.cmpi ne, %31, %c0_i32_15 : i32
      scf.if %32 {
        %c1_i32_63 = arith.constant 1 : i32
        %108 = arith.addi %arg2, %c1_i32_63 : i32
        %c1_i32_64 = arith.constant 1 : i32
        %109 = arith.subi %c1_i32_64, %20 : i32
        %c384_i32_65 = arith.constant 384 : i32
        %110 = arith.muli %108, %c384_i32_65 : i32
        %111 = tpu.assume_multiple %110, 128 : i32
        %c0_i32_66 = arith.constant 0 : i32
        %112 = tpu.memref_slice %arg3[%arg0, %c0_i32_66, %111] : memref<2x4x512xbf16, #tpu.memory_space<any>> -> memref<1x4x512xbf16, #tpu.memory_space<any>>
        %113 = tpu.memref_squeeze %112 : memref<1x4x512xbf16, #tpu.memory_space<any>> -> memref<4x512xbf16, #tpu.memory_space<any>>
        %c0_i32_67 = arith.constant 0 : i32
        %c0_i32_68 = arith.constant 0 : i32
        %114 = tpu.memref_slice %arg8[%109, %c0_i32_67, %c0_i32_68] : memref<2x4x512xbf16, #tpu.memory_space<vmem>> -> memref<1x4x512xbf16, #tpu.memory_space<vmem>>
        %115 = tpu.memref_squeeze %114 : memref<1x4x512xbf16, #tpu.memory_space<vmem>> -> memref<4x512xbf16, #tpu.memory_space<vmem>>
        %116 = tpu.memref_slice %arg9[%109] : memref<2x!tpu.dma_semaphore, #tpu.memory_space<semaphore_mem>> -> memref<1x!tpu.dma_semaphore, #tpu.memory_space<semaphore_mem>>
        %117 = tpu.memref_squeeze %116 : memref<1x!tpu.dma_semaphore, #tpu.memory_space<semaphore_mem>> -> memref<!tpu.dma_semaphore, #tpu.memory_space<semaphore_mem>>
        tpu.enqueue_dma source(%113 : memref<4x512xbf16, #tpu.memory_space<any>>) target(%115 : memref<4x512xbf16, #tpu.memory_space<vmem>>) target_semaphore(%117 : memref<!tpu.dma_semaphore, #tpu.memory_space<semaphore_mem>>)
      } else {
      }
      %33 = arith.index_cast %20 : i32 to index
      %c0 = arith.constant 0 : index
      %c0_16 = arith.constant 0 : index
      %34 = vector.load %arg8[%33, %c0, %c0_16] : memref<2x4x512xbf16, #tpu.memory_space<vmem>>, vector<1x4x512xbf16>
      %35 = vector.shape_cast %34 : vector<1x4x512xbf16> to vector<4x512xbf16>
      %cst = arith.constant 0.000000e+00 : f32
      %36 = vector.broadcast %cst : f32 to vector<4x384xf32>
      %37 = vector.extract_strided_slice %35 {offsets = [0, 0], sizes = [4, 384], strides = [1, 1]} : vector<4x512xbf16> to vector<4x384xbf16>
      %c0_17 = arith.constant 0 : index
      %c0_18 = arith.constant 0 : index
      %c0_19 = arith.constant 0 : index
      %38 = vector.load %arg4[%c0_17, %c0_18, %c0_19] : memref<9x4x4xbf16, #tpu.memory_space<vmem>>, vector<1x4x4xbf16>
      %39 = vector.shape_cast %38 : vector<1x4x4xbf16> to vector<4x4xbf16>
      %cst_20 = arith.constant dense<0.000000e+00> : vector<4x384xf32>
      %40 = tpu.matmul %39, %37, %cst_20 {dimension_numbers = #tpu.dot_dimension_numbers<[1], [0], [0], [1], [0, 0, 1, 1], [], []>} : vector<4x4xbf16>, vector<4x384xbf16>, vector<4x384xf32> -> vector<4x384xf32>
      %41 = arith.addf %36, %40 : vector<4x384xf32>
      %42 = vector.extract_strided_slice %35 {offsets = [0, 1], sizes = [4, 384], strides = [1, 1]} : vector<4x512xbf16> to vector<4x384xbf16>
      %c1 = arith.constant 1 : index
      %c0_21 = arith.constant 0 : index
      %c0_22 = arith.constant 0 : index
      %43 = vector.load %arg4[%c1, %c0_21, %c0_22] : memref<9x4x4xbf16, #tpu.memory_space<vmem>>, vector<1x4x4xbf16>
      %44 = vector.shape_cast %43 : vector<1x4x4xbf16> to vector<4x4xbf16>
      %cst_23 = arith.constant dense<0.000000e+00> : vector<4x384xf32>
      %45 = tpu.matmul %44, %42, %cst_23 {dimension_numbers = #tpu.dot_dimension_numbers<[1], [0], [0], [1], [0, 0, 1, 1], [], []>} : vector<4x4xbf16>, vector<4x384xbf16>, vector<4x384xf32> -> vector<4x384xf32>
      %46 = arith.addf %41, %45 : vector<4x384xf32>
      %47 = vector.extract_strided_slice %35 {offsets = [0, 2], sizes = [4, 384], strides = [1, 1]} : vector<4x512xbf16> to vector<4x384xbf16>
      %c2 = arith.constant 2 : index
      %c0_24 = arith.constant 0 : index
      %c0_25 = arith.constant 0 : index
      %48 = vector.load %arg4[%c2, %c0_24, %c0_25] : memref<9x4x4xbf16, #tpu.memory_space<vmem>>, vector<1x4x4xbf16>
      %49 = vector.shape_cast %48 : vector<1x4x4xbf16> to vector<4x4xbf16>
      %cst_26 = arith.constant dense<0.000000e+00> : vector<4x384xf32>
      %50 = tpu.matmul %49, %47, %cst_26 {dimension_numbers = #tpu.dot_dimension_numbers<[1], [0], [0], [1], [0, 0, 1, 1], [], []>} : vector<4x4xbf16>, vector<4x384xbf16>, vector<4x384xf32> -> vector<4x384xf32>
      %51 = arith.addf %46, %50 : vector<4x384xf32>
      %52 = vector.extract_strided_slice %35 {offsets = [0, 24], sizes = [4, 384], strides = [1, 1]} : vector<4x512xbf16> to vector<4x384xbf16>
      %c3 = arith.constant 3 : index
      %c0_27 = arith.constant 0 : index
      %c0_28 = arith.constant 0 : index
      %53 = vector.load %arg4[%c3, %c0_27, %c0_28] : memref<9x4x4xbf16, #tpu.memory_space<vmem>>, vector<1x4x4xbf16>
      %54 = vector.shape_cast %53 : vector<1x4x4xbf16> to vector<4x4xbf16>
      %cst_29 = arith.constant dense<0.000000e+00> : vector<4x384xf32>
      %55 = tpu.matmul %54, %52, %cst_29 {dimension_numbers = #tpu.dot_dimension_numbers<[1], [0], [0], [1], [0, 0, 1, 1], [], []>} : vector<4x4xbf16>, vector<4x384xbf16>, vector<4x384xf32> -> vector<4x384xf32>
      %56 = arith.addf %51, %55 : vector<4x384xf32>
      %57 = vector.extract_strided_slice %35 {offsets = [0, 25], sizes = [4, 384], strides = [1, 1]} : vector<4x512xbf16> to vector<4x384xbf16>
      %c4 = arith.constant 4 : index
      %c0_30 = arith.constant 0 : index
      %c0_31 = arith.constant 0 : index
      %58 = vector.load %arg4[%c4, %c0_30, %c0_31] : memref<9x4x4xbf16, #tpu.memory_space<vmem>>, vector<1x4x4xbf16>
      %59 = vector.shape_cast %58 : vector<1x4x4xbf16> to vector<4x4xbf16>
      %cst_32 = arith.constant dense<0.000000e+00> : vector<4x384xf32>
      %60 = tpu.matmul %59, %57, %cst_32 {dimension_numbers = #tpu.dot_dimension_numbers<[1], [0], [0], [1], [0, 0, 1, 1], [], []>} : vector<4x4xbf16>, vector<4x384xbf16>, vector<4x384xf32> -> vector<4x384xf32>
      %61 = arith.addf %56, %60 : vector<4x384xf32>
      %62 = vector.extract_strided_slice %35 {offsets = [0, 26], sizes = [4, 384], strides = [1, 1]} : vector<4x512xbf16> to vector<4x384xbf16>
      %c5 = arith.constant 5 : index
      %c0_33 = arith.constant 0 : index
      %c0_34 = arith.constant 0 : index
      %63 = vector.load %arg4[%c5, %c0_33, %c0_34] : memref<9x4x4xbf16, #tpu.memory_space<vmem>>, vector<1x4x4xbf16>
      %64 = vector.shape_cast %63 : vector<1x4x4xbf16> to vector<4x4xbf16>
      %cst_35 = arith.constant dense<0.000000e+00> : vector<4x384xf32>
      %65 = tpu.matmul %64, %62, %cst_35 {dimension_numbers = #tpu.dot_dimension_numbers<[1], [0], [0], [1], [0, 0, 1, 1], [], []>} : vector<4x4xbf16>, vector<4x384xbf16>, vector<4x384xf32> -> vector<4x384xf32>
      %66 = arith.addf %61, %65 : vector<4x384xf32>
      %67 = vector.extract_strided_slice %35 {offsets = [0, 48], sizes = [4, 384], strides = [1, 1]} : vector<4x512xbf16> to vector<4x384xbf16>
      %c6 = arith.constant 6 : index
      %c0_36 = arith.constant 0 : index
      %c0_37 = arith.constant 0 : index
      %68 = vector.load %arg4[%c6, %c0_36, %c0_37] : memref<9x4x4xbf16, #tpu.memory_space<vmem>>, vector<1x4x4xbf16>
      %69 = vector.shape_cast %68 : vector<1x4x4xbf16> to vector<4x4xbf16>
      %cst_38 = arith.constant dense<0.000000e+00> : vector<4x384xf32>
      %70 = tpu.matmul %69, %67, %cst_38 {dimension_numbers = #tpu.dot_dimension_numbers<[1], [0], [0], [1], [0, 0, 1, 1], [], []>} : vector<4x4xbf16>, vector<4x384xbf16>, vector<4x384xf32> -> vector<4x384xf32>
      %71 = arith.addf %66, %70 : vector<4x384xf32>
      %72 = vector.extract_strided_slice %35 {offsets = [0, 49], sizes = [4, 384], strides = [1, 1]} : vector<4x512xbf16> to vector<4x384xbf16>
      %c7 = arith.constant 7 : index
      %c0_39 = arith.constant 0 : index
      %c0_40 = arith.constant 0 : index
      %73 = vector.load %arg4[%c7, %c0_39, %c0_40] : memref<9x4x4xbf16, #tpu.memory_space<vmem>>, vector<1x4x4xbf16>
      %74 = vector.shape_cast %73 : vector<1x4x4xbf16> to vector<4x4xbf16>
      %cst_41 = arith.constant dense<0.000000e+00> : vector<4x384xf32>
      %75 = tpu.matmul %74, %72, %cst_41 {dimension_numbers = #tpu.dot_dimension_numbers<[1], [0], [0], [1], [0, 0, 1, 1], [], []>} : vector<4x4xbf16>, vector<4x384xbf16>, vector<4x384xf32> -> vector<4x384xf32>
      %76 = arith.addf %71, %75 : vector<4x384xf32>
      %77 = vector.extract_strided_slice %35 {offsets = [0, 50], sizes = [4, 384], strides = [1, 1]} : vector<4x512xbf16> to vector<4x384xbf16>
      %c8 = arith.constant 8 : index
      %c0_42 = arith.constant 0 : index
      %c0_43 = arith.constant 0 : index
      %78 = vector.load %arg4[%c8, %c0_42, %c0_43] : memref<9x4x4xbf16, #tpu.memory_space<vmem>>, vector<1x4x4xbf16>
      %79 = vector.shape_cast %78 : vector<1x4x4xbf16> to vector<4x4xbf16>
      %cst_44 = arith.constant dense<0.000000e+00> : vector<4x384xf32>
      %80 = tpu.matmul %79, %77, %cst_44 {dimension_numbers = #tpu.dot_dimension_numbers<[1], [0], [0], [1], [0, 0, 1, 1], [], []>} : vector<4x4xbf16>, vector<4x384xbf16>, vector<4x384xf32> -> vector<4x384xf32>
      %81 = arith.addf %76, %80 : vector<4x384xf32>
      %c0_45 = arith.constant 0 : index
      %c0_46 = arith.constant 0 : index
      %82 = vector.load %arg5[%c0_45, %c0_46] : memref<4x1xf32, #tpu.memory_space<vmem>>, vector<4x1xf32>
      %83 = vector.broadcast %82 : vector<4x1xf32> to vector<4x384xf32>
      %84 = arith.addf %81, %83 : vector<4x384xf32>
      %85 = arith.index_cast %arg2 : i32 to index
      %c0_47 = arith.constant 0 : index
      %c0_48 = arith.constant 0 : index
      %86 = vector.load %arg10[%85, %c0_47, %c0_48] : memref<1x4x384xf32, #tpu.memory_space<vmem>>, vector<1x4x384xf32>
      %87 = vector.shape_cast %86 : vector<1x4x384xf32> to vector<4x384xf32>
      %88 = vector.shape_cast %84 : vector<4x384xf32> to vector<1x4x384xf32>
      tpu.vector_store %arg10[%85, %c0_47, %c0_48], %88 {strides = array<i32>} : memref<1x4x384xf32, #tpu.memory_space<vmem>>, vector<1x4x384xf32>,
      %89 = vector.extract_strided_slice %35 {offsets = [0, 25], sizes = [4, 384], strides = [1, 1]} : vector<4x512xbf16> to vector<4x384xbf16>
      %90 = arith.index_cast %arg2 : i32 to index
      %c0_49 = arith.constant 0 : index
      %c0_50 = arith.constant 0 : index
      %91 = vector.load %arg11[%90, %c0_49, %c0_50] : memref<1x4x384xbf16, #tpu.memory_space<vmem>>, vector<1x4x384xbf16>
      %92 = vector.shape_cast %91 : vector<1x4x384xbf16> to vector<4x384xbf16>
      %93 = vector.shape_cast %89 : vector<4x384xbf16> to vector<1x4x384xbf16>
      tpu.vector_store %arg11[%90, %c0_49, %c0_50], %93 {strides = array<i32>} : memref<1x4x384xbf16, #tpu.memory_space<vmem>>, vector<1x4x384xbf16>,
      %c0_51 = arith.constant 0 : index
      %c0_52 = arith.constant 0 : index
      %94 = vector.load %arg6[%c0_51, %c0_52] : memref<1x384xf32, #tpu.memory_space<vmem>>, vector<1x384xf32>
      %95 = vector.broadcast %94 : vector<1x384xf32> to vector<4x384xf32>
      %96 = arith.mulf %84, %95 : vector<4x384xf32>
      %c0_53 = arith.constant 0 : index
      %c0_54 = arith.constant 0 : index
      %97 = vector.load %arg12[%c0_53, %c0_54] : memref<4x1xf32, #tpu.memory_space<vmem>>, vector<4x1xf32>
      %cst_55 = arith.constant dense<0.000000e+00> : vector<4xf32>
      %98 = vector.multi_reduction <add>, %96, %cst_55 [1] : vector<4x384xf32> to vector<4xf32>
      %99 = vector.shape_cast %98 : vector<4xf32> to vector<4x1xf32>
      %100 = arith.addf %97, %99 : vector<4x1xf32>
      %c0_56 = arith.constant 0 : index
      %c0_57 = arith.constant 0 : index
      %101 = vector.load %arg12[%c0_56, %c0_57] : memref<4x1xf32, #tpu.memory_space<vmem>>, vector<4x1xf32>
      tpu.vector_store %arg12[%c0_56, %c0_57], %100 {strides = array<i32>} : memref<4x1xf32, #tpu.memory_space<vmem>>, vector<4x1xf32>,
      %c0_58 = arith.constant 0 : index
      %c0_59 = arith.constant 0 : index
      %102 = vector.load %arg13[%c0_58, %c0_59] : memref<4x1xf32, #tpu.memory_space<vmem>>, vector<4x1xf32>
      %103 = arith.mulf %96, %84 : vector<4x384xf32>
      %cst_60 = arith.constant dense<0.000000e+00> : vector<4xf32>
      %104 = vector.multi_reduction <add>, %103, %cst_60 [1] : vector<4x384xf32> to vector<4xf32>
      %105 = vector.shape_cast %104 : vector<4xf32> to vector<4x1xf32>
      %106 = arith.addf %102, %105 : vector<4x1xf32>
      %c0_61 = arith.constant 0 : index
      %c0_62 = arith.constant 0 : index
      %107 = vector.load %arg13[%c0_61, %c0_62] : memref<4x1xf32, #tpu.memory_space<vmem>>, vector<4x1xf32>
      tpu.vector_store %arg13[%c0_61, %c0_62], %106 {strides = array<i32>} : memref<4x1xf32, #tpu.memory_space<vmem>>, vector<4x1xf32>,
    } else {
    }
    %c1_i32 = arith.constant 1 : i32
    %8 = arith.cmpi eq, %arg1, %c1_i32 : i32
    %9 = arith.extui %8 : i1 to i32
    %c0_i32_4 = arith.constant 0 : i32
    %10 = arith.cmpi ne, %9, %c0_i32_4 : i32
    scf.if %10 {
      %c0 = arith.constant 0 : index
      %c0_5 = arith.constant 0 : index
      %11 = vector.load %arg12[%c0, %c0_5] : memref<4x1xf32, #tpu.memory_space<vmem>>, vector<4x1xf32>
      %cst = arith.constant 3.906250e-03 : f32
      %12 = vector.broadcast %cst : f32 to vector<4x1xf32>
      %13 = arith.mulf %11, %12 : vector<4x1xf32>
      %c0_6 = arith.constant 0 : index
      %c0_7 = arith.constant 0 : index
      %14 = vector.load %arg13[%c0_6, %c0_7] : memref<4x1xf32, #tpu.memory_space<vmem>>, vector<4x1xf32>
      %cst_8 = arith.constant 3.906250e-03 : f32
      %15 = vector.broadcast %cst_8 : f32 to vector<4x1xf32>
      %16 = arith.mulf %14, %15 : vector<4x1xf32>
      %17 = arith.mulf %13, %13 : vector<4x1xf32>
      %18 = arith.subf %16, %17 : vector<4x1xf32>
      %cst_9 = arith.constant 9.99999974E-6 : f32
      %19 = vector.broadcast %cst_9 : f32 to vector<4x1xf32>
      %20 = arith.addf %18, %19 : vector<4x1xf32>
      %21 = math.rsqrt %20 : vector<4x1xf32>
      %22 = arith.index_cast %arg2 : i32 to index
      %c0_10 = arith.constant 0 : index
      %c0_11 = arith.constant 0 : index
      %23 = vector.load %arg10[%22, %c0_10, %c0_11] : memref<1x4x384xf32, #tpu.memory_space<vmem>>, vector<1x4x384xf32>
      %24 = vector.shape_cast %23 : vector<1x4x384xf32> to vector<4x384xf32>
      %25 = arith.index_cast %arg2 : i32 to index
      %c0_12 = arith.constant 0 : index
      %c0_13 = arith.constant 0 : index
      %26 = vector.load %arg11[%25, %c0_12, %c0_13] : memref<1x4x384xbf16, #tpu.memory_space<vmem>>, vector<1x4x384xbf16>
      %27 = vector.shape_cast %26 : vector<1x4x384xbf16> to vector<4x384xbf16>
      %28 = arith.extf %27 : vector<4x384xbf16> to vector<4x384xf32>
      %29 = vector.broadcast %13 : vector<4x1xf32> to vector<4x384xf32>
      %30 = arith.subf %24, %29 : vector<4x384xf32>
      %31 = vector.broadcast %21 : vector<4x1xf32> to vector<4x384xf32>
      %32 = arith.mulf %30, %31 : vector<4x384xf32>
      %33 = arith.addf %28, %32 : vector<4x384xf32>
      %c0_14 = arith.constant 0 : index
      %c0_15 = arith.constant 0 : index
      %c0_16 = arith.constant 0 : index
      %34 = vector.load %arg7[%c0_14, %c0_15, %c0_16] : memref<1x4x384xf32, #tpu.memory_space<vmem>>, vector<1x4x384xf32>
      %35 = vector.shape_cast %34 : vector<1x4x384xf32> to vector<4x384xf32>
      %36 = vector.shape_cast %33 : vector<4x384xf32> to vector<1x4x384xf32>
      tpu.vector_store %arg7[%c0_14, %c0_15, %c0_16], %36 {strides = array<i32>} : memref<1x4x384xf32, #tpu.memory_space<vmem>>, vector<1x4x384xf32>,
    } else {
    }
    return
  }
  func.func @transform_1(%arg0: i32, %arg1: i32, %arg2: i32) -> (i32, i32, i32) {
    %c0_i32 = arith.constant 0 : i32
    %c0_i32_0 = arith.constant 0 : i32
    %c0_i32_1 = arith.constant 0 : i32
    %c0_i32_2 = arith.constant 0 : i32
    return %c0_i32, %c0_i32_0, %c0_i32_1 : i32, i32, i32
  }
  func.func @transform_2(%arg0: i32, %arg1: i32, %arg2: i32) -> (i32, i32) {
    %c0_i32 = arith.constant 0 : i32
    %c0_i32_0 = arith.constant 0 : i32
    %c0_i32_1 = arith.constant 0 : i32
    return %c0_i32, %c0_i32_0 : i32, i32
  }
  func.func @transform_3(%arg0: i32, %arg1: i32, %arg2: i32) -> (i32, i32) {
    %c0_i32 = arith.constant 0 : i32
    %c0_i32_0 = arith.constant 0 : i32
    %c0_i32_1 = arith.constant 0 : i32
    return %c0_i32, %c0_i32_0 : i32, i32
  }
  func.func @transform_4(%arg0: i32, %arg1: i32, %arg2: i32) -> (i32, i32, i32) {
    %0 = arith.muli %arg2, %arg1 : i32
    %c0_i32 = arith.constant 0 : i32
    %c0_i32_0 = arith.constant 0 : i32
    return %arg0, %c0_i32, %0 : i32, i32, i32
  }
}

</mosaic_0001>

<llo_original>
// kernel: tpu_custom_call.1
$region0: #{tpu_custom_call.1}
  #allocation0 [shape = 'u32[]', space=smem, size = 0x4, offset = 0x4, fixed_abs, tag = 'smem constant byte address 0x4 - core index']
  #allocation1 [shape = 'u32[144,128]{1,0:T(1,128)}', space=vmem, size = 0x12000, scoped, tag = 'internal scratch']
  #allocation2 [shape = 'bf16[2,4,512]{2,1,0:T(4,128)(2,1)}', space=vmem, size = 0x2000, scoped, tag = 'scratch operand']
  #allocation3 [shape = 's32[2]{0}', space=sflag, size = 0x8, scoped, tag = 'scratch operand']
  #allocation4 [shape = 'f32[1,4,384]{2,1,0:T(4,128)}', space=vmem, size = 0x1800, scoped, tag = 'scratch operand']
  #allocation5 [shape = 'bf16[1,4,384]{2,1,0:T(4,128)(2,1)}', space=vmem, size = 0xc00, scoped, tag = 'scratch operand']
  #allocation6 [shape = 'f32[4,1]{1,0:T(4,128)}', space=vmem, size = 0x800, scoped, tag = 'scratch operand']
  #allocation7 [shape = 'f32[4,1]{1,0:T(4,128)}', space=vmem, size = 0x800, scoped, tag = 'scratch operand']
  #allocation10 [shape = 's32[]', space=sflag, size = 0x4, offset = 0, fixed_abs, tag = 'sflag constant byte address 0x0 - dummy sync flag']
  #allocation11 [shape = 's32[]', space=sflag, size = 0x4, offset = 0, fixed_abs, tag = 'sflag constant byte address 0x0 - dummy sync flag']
  %s0 = inlined_call_operand.vmem [shape: bf16[2,4,512], index: 0, kind: input, shape index: {}]
  %s1 = inlined_call_operand.vmem [shape: bf16[9,4,4], index: 1, kind: input, shape index: {}]
  %s2 = inlined_call_operand.vmem [shape: f32[4,1], index: 2, kind: input, shape index: {}]
  %s3 = inlined_call_operand.vmem [shape: f32[1,384], index: 3, kind: input, shape index: {}]
  %s4 = inlined_call_operand.hbm [shape: f32[2,4,384], index: 4, kind: output, shape index: {}]
  %s5 = sld [smem:[#allocation0]]
  $region129: #{tpu_custom_call.1} parent=0
    _
  %s7 = ssub.s32 1, %s5
  %s8 = scalar_select 0, %s7, %s5
  $region1: #{tpu_custom_call.1} parent=0
    #allocation8 [shape = 'u8[12288]{0}', space=vmem, size = 0x3000, scoped, tag = 'output window, operand 0']
    #allocation9 [shape = 's32[2]{0}', space=sflag, size = 0x8, scoped, tag = 'scoped memory for tpu_custom_call.1']
    %9 = vsyncpa [#allocation9], 0
    %s10 = scalar_lea.sflag [#allocation9], 1
    %11 = vsyncpa %s10, 0
    loop: start=0, step=1, limit=6
    $region2: #{tpu_custom_call.1} parent=1 // loop_pre_header
      _
    $region3: #{tpu_custom_call.1} parent=1 // loop_header
      %s13 = sphi 0, %s17
      %p14 = scmp.ge.s32.totalorder %s13, 6
      %s20 = sphi 0, %s39
      %s21 = sphi 0, %s35
      %s22 = sphi 0, %s31
      %s23 = sphi 0, %s20
      %s24 = sphi 0, %s21
      %s25 = sphi 0, %s22
      %s26 = sphi 0, %s23
      %s27 = sphi 0, %s24
      %s28 = sphi 0, %s25
      %s40 = sphi 0, %s40
      %s42 = sphi 0, %s40
      %s43 = sphi 0, %s42
      %s57 = sphi 0, %s43
      %s61 = sphi 0, %s61
      %s63 = sphi 0, %s61
      %s64 = sphi 0, %s63
      %s78 = sphi 0, %s64
      %s82 = sphi 0, %s82
      %s84 = sphi 0, %s82
      %s85 = sphi 0, %s84
      %s99 = sphi 0, %s85
      %s109 = sphi 0, %s111
      %s112 = sphi 0, %s109
      %s113 = sphi 0, %s112
      %s129 = sphi 0, %s113
    $region4: #{tpu_custom_call.1} parent=1 // loop_header_branch
      %16 = sbr.rel (%p14) target = $region8
    $region5: #{tpu_custom_call.1} parent=1 // loop_body
      %s18 = ssub.s32 %s13, 1
      %s19 = ssub.s32 %s13, 2
      %s29 = sadd.s32 1, %s22
      %p30 = scmp.ge.s32.totalorder %s29, 1
      %s31 = scalar_select %p30, 0, %s29
      %s32 = sadd.s32 1, %s21
      %s33 = scalar_select %p30, %s32, %s21
      %p34 = scmp.ge.s32.totalorder %s33, 2
      %s35 = scalar_select %p34, 0, %s33
      %s36 = sadd.s32 1, %s20
      %s37 = scalar_select %p34, %s36, %s20
      %p38 = scmp.ge.s32.totalorder %s37, 2
      %s39 = scalar_select %p38, 0, %s37
      %s41 = sadd.s32 %s40, 1
      %p44 = scmp.eq.s32.totalorder %s13, 3
      %p45 = scmp.ne.s32.totalorder %s40, %s42
      %p46 = scmp.eq.s32.totalorder %s13, 0
      %p47 = por %p45, %p46
      %p48 = scmp.ne.s32.totalorder %s40, %s42
      %p49 = scmp.eq.s32.totalorder %s18, 3
      %p50 = por %p48, %p49
      %p51 = scmp.ne.s32.totalorder %s42, %s43
      %p52 = scmp.eq.s32.totalorder %s18, 0
      %p53 = por %p51, %p52
      %p54 = scmp.ne.s32.totalorder %s42, %s43
      %p55 = scmp.eq.s32.totalorder %s19, 3
      %p56 = por %p54, %p55
      %p58 = scmp.ne.s32.totalorder %s43, %s57
      %p59 = scmp.eq.s32.totalorder %s19, 0
      %p60 = por %p58, %p59
      %s62 = sadd.s32 %s61, 1
      %p65 = scmp.eq.s32.totalorder %s13, 3
      %p66 = scmp.ne.s32.totalorder %s61, %s63
      %p67 = scmp.eq.s32.totalorder %s13, 0
      %p68 = por %p66, %p67
      %p69 = scmp.ne.s32.totalorder %s61, %s63
      %p70 = scmp.eq.s32.totalorder %s18, 3
      %p71 = por %p69, %p70
      %p72 = scmp.ne.s32.totalorder %s63, %s64
      %p73 = scmp.eq.s32.totalorder %s18, 0
      %p74 = por %p72, %p73
      %p75 = scmp.ne.s32.totalorder %s63, %s64
      %p76 = scmp.eq.s32.totalorder %s19, 3
      %p77 = por %p75, %p76
      %p79 = scmp.ne.s32.totalorder %s64, %s78
      %p80 = scmp.eq.s32.totalorder %s19, 0
      %p81 = por %p79, %p80
      %s83 = sadd.s32 %s82, 1
      %p86 = scmp.eq.s32.totalorder %s13, 3
      %p87 = scmp.ne.s32.totalorder %s82, %s84
      %p88 = scmp.eq.s32.totalorder %s13, 0
      %p89 = por %p87, %p88
      %p90 = scmp.ne.s32.totalorder %s82, %s84
      %p91 = scmp.eq.s32.totalorder %s18, 3
      %p92 = por %p90, %p91
      %p93 = scmp.ne.s32.totalorder %s84, %s85
      %p94 = scmp.eq.s32.totalorder %s18, 0
      %p95 = por %p93, %p94
      %p96 = scmp.ne.s32.totalorder %s84, %s85
      %p97 = scmp.eq.s32.totalorder %s19, 3
      %p98 = por %p96, %p97
      %p100 = scmp.ne.s32.totalorder %s85, %s99
      %p101 = scmp.eq.s32.totalorder %s19, 0
      %p102 = por %p100, %p101
      %s103 = smul.u32 %s22, %s21
      %s104 = smul.u32 %s31, %s35
      %s105 = ssub.s32 %s20, %s39
      %s106 = ssub.s32 %s103, %s104
      %s107 = sor.u32 %s105, %s106
      %p108 = scmp.eq.s32.totalorder %s107, 0
      %s110 = sadd.s32 %s109, 1
      %s111 = scalar_select %p108, %s109, %s110
      %p114 = pneg %p108
      %p115 = scmp.eq.s32.totalorder %s13, 3
      %p116 = por %p114, %p115
      %p117 = scmp.ne.s32.totalorder %s109, %s112
      %p118 = scmp.eq.s32.totalorder %s13, 0
      %p119 = por %p117, %p118
      %p120 = scmp.ne.s32.totalorder %s109, %s112
      %p121 = scmp.eq.s32.totalorder %s18, 3
      %p122 = por %p120, %p121
      %p123 = scmp.ne.s32.totalorder %s112, %s113
      %p124 = scmp.eq.s32.totalorder %s18, 0
      %p125 = por %p123, %p124
      %p126 = scmp.ne.s32.totalorder %s112, %s113
      %p127 = scmp.eq.s32.totalorder %s19, 3
      %p128 = por %p126, %p127
      %p130 = scmp.ne.s32.totalorder %s113, %s129
      %p131 = scmp.eq.s32.totalorder %s19, 0
      %p132 = por %p130, %p131
      %p133 = scmp.le.s32.totalorder 1, %s13
      %p134 = scmp.lt.s32.totalorder %s13, 5
      %p135 = pnand %p133, %p134
      %p136 = pneg %p135
      // Predicated region
      $region9: #{tpu_custom_call.1} parent=5 // pred_check
        _
      $region10: #{tpu_custom_call.1} parent=5 // pred_check_branch
        %138 = sbr.rel (%p135) target = $region12
      $region11: #{tpu_custom_call.1} parent=5 // pred_region
        %s139 = ssub.s32 %s13, 1
        // Predicated region
        $region13: #{tpu_custom_call.1} parent=11 // pred_check
          %p140 = pneg %p53
        $region14: #{tpu_custom_call.1} parent=11 // pred_check_branch
          %142 = sbr.rel (%p140) target = $region16
        $region15: #{tpu_custom_call.1} parent=11 // pred_region
          _
        $region16: #{tpu_custom_call.1} parent=11 // pred_fallthru
          _
        // Predicated region
        $region17: #{tpu_custom_call.1} parent=11 // pred_check
          %p143 = pneg %p74
        $region18: #{tpu_custom_call.1} parent=11 // pred_check_branch
          %145 = sbr.rel (%p143) target = $region20
        $region19: #{tpu_custom_call.1} parent=11 // pred_region
          _
        $region20: #{tpu_custom_call.1} parent=11 // pred_fallthru
          _
        // Predicated region
        $region21: #{tpu_custom_call.1} parent=11 // pred_check
          %p146 = pneg %p95
        $region22: #{tpu_custom_call.1} parent=11 // pred_check_branch
          %148 = sbr.rel (%p146) target = $region24
        $region23: #{tpu_custom_call.1} parent=11 // pred_region
          _
        $region24: #{tpu_custom_call.1} parent=11 // pred_fallthru
          _
      $region12: #{tpu_custom_call.1} parent=5 // pred_fallthru
        _
      %p149 = scmp.lt.s32.totalorder %s13, 4
      // Predicated region
      $region25: #{tpu_custom_call.1} parent=5 // pred_check
        %p150 = pneg %p149
      $region26: #{tpu_custom_call.1} parent=5 // pred_check_branch
        %152 = sbr.rel (%p150) target = $region28
      $region27: #{tpu_custom_call.1} parent=5 // pred_region
        _
      $region28: #{tpu_custom_call.1} parent=5 // pred_fallthru
        _
      %p153 = scmp.le.s32.totalorder 1, %s13
      %p154 = scmp.lt.s32.totalorder %s13, 5
      %p155 = pnand %p153, %p154
      %p156 = pneg %p155
      // Predicated region
      $region29: #{tpu_custom_call.1} parent=5 // pred_check
        _
      $region30: #{tpu_custom_call.1} parent=5 // pred_check_branch
        %158 = sbr.rel (%p155) target = $region32
      $region31: #{tpu_custom_call.1} parent=5 // pred_region
        %s159 = ssub.s32 %s13, 1
        %p160 = pneg %p53
        %p161 = pneg %p50
        %p162 = pneg %p74
        %p163 = pneg %p71
        %p164 = pneg %p95
        %p165 = pneg %p92
        %p166 = pneg %p125
        %p167 = pneg %p122
        %s168 = sand.u32 %s112, 1
        %s169 = scalar_lea.sflag [#allocation9], %s168
        %s170 = sand.u32 %s112, 1
        %s171 = smul.addr %s170, 12
        %s172 = scalar_lea.vmem [#allocation8], %s171
        %s173 = smul.u32 %s25, %s24
        %s174 = smul.u32 3, %s173
        %p176 = scmp.eq.s32.totalorder %s24, 0
        %p177 = scmp.eq.s32.totalorder %s25, 0
        %p178 = pnand %p176, %p177
        %p179 = pneg %p178
        // Predicated region
        $region33: #{tpu_custom_call.1} parent=31 // pred_check
          _
        $region34: #{tpu_custom_call.1} parent=31 // pred_check_branch
          %181 = sbr.rel (%p178) target = $region36
        $region35: #{tpu_custom_call.1} parent=31 // pred_region
          %vm182 = vcmask 3072
          %183 = vst.msk [vmem:[#allocation6] sm:$0xf] %vm182, 0.0
          %184 = vst.msk [vmem:[#allocation7] sm:$0xf] %vm182, 0.0
          %s185 = smul.u32 %s25, 384
          %s186 = sshra.s32 %s185, 7
          %s187 = sand.u32 %s185, 127
          %s188 = smul.u32 %s23, 4
          %s189 = sadd.s32 %s186, %s188
          %s190 = smul.addr %s189, 2
          %s191 = scalar_lea.vmem %s0, %s190
          %p193 = scmp.lt.u32.totalorder 8, 8
          %p194 = pneg %p193
          // Predicated region
          $region37: #{tpu_custom_call.1} parent=35 // pred_check
            _
          $region38: #{tpu_custom_call.1} parent=35 // pred_check_branch
            %196 = sbr.rel (%p193) target = $region40
          $region39: #{tpu_custom_call.1} parent=35 // pred_region
            %s212 = sand.u32 8, 7
            %p213 = scmp.eq.s32.totalorder %s212, 0
            // Predicated region
            $region52: #{tpu_custom_call.1} parent=39 // pred_check
              %p214 = pneg %p213
            $region53: #{tpu_custom_call.1} parent=39 // pred_check_branch
              %216 = sbr.rel (%p214) target = $region55
            $region54: #{tpu_custom_call.1} parent=39 // pred_region
              loop: start=0, step=1, limit=1
              $region56: #{tpu_custom_call.1} parent=54 // loop_pre_header
                _
              $region57: #{tpu_custom_call.1} parent=54 // loop_header
                %s218 = sphi 0, %s222
                %p219 = scmp.ge.s32.totalorder %s218, 1
                %s223 = sphi %s191, %s191
                %s224 = sphi [#allocation2], [#allocation2]
              $region58: #{tpu_custom_call.1} parent=54 // loop_header_branch
                %221 = sbr.rel (%p219) target = $region62
              $region59: #{tpu_custom_call.1} parent=54 // loop_body
                %v225 = vld [vmem:[%s223] sm:$0xff]
                %226 = vst [vmem:[%s224] sm:$0xff] %v225
              $region60: #{tpu_custom_call.1} parent=54 // loop_footer
                %s222 = sadd.s32 1, %s218
              $region61: #{tpu_custom_call.1} parent=54 // loop_footer_branch
                %217 = sbr.rel target = $region57
              $region62: #{tpu_custom_call.1} parent=54 // loop_exit
                _
            $region55: #{tpu_custom_call.1} parent=39 // pred_fallthru
              _
            %p227 = pneg %p213
            // Predicated region
            $region63: #{tpu_custom_call.1} parent=39 // pred_check
              _
            $region64: #{tpu_custom_call.1} parent=39 // pred_check_branch
              %229 = sbr.rel (%p213) target = $region66
            $region65: #{tpu_custom_call.1} parent=39 // pred_region
              %s230 = sand.u32 8, 7
            $region66: #{tpu_custom_call.1} parent=39 // pred_fallthru
              _
          $region40: #{tpu_custom_call.1} parent=35 // pred_fallthru
            _
          // Predicated region
          $region41: #{tpu_custom_call.1} parent=35 // pred_check
            %p197 = pneg %p193
          $region42: #{tpu_custom_call.1} parent=35 // pred_check_branch
            %199 = sbr.rel (%p197) target = $region44
          $region43: #{tpu_custom_call.1} parent=35 // pred_region
            %s200 = sshll.u32 1, 8
            %s201 = ssub.s32 %s200, 1
            loop: start=0, step=1, limit=1
            $region45: #{tpu_custom_call.1} parent=43 // loop_pre_header
              _
            $region46: #{tpu_custom_call.1} parent=43 // loop_header
              %s203 = sphi 0, %s207
              %p204 = scmp.ge.s32.totalorder %s203, 1
              %s208 = sphi %s191, %s191
              %s209 = sphi [#allocation2], [#allocation2]
            $region47: #{tpu_custom_call.1} parent=43 // loop_header_branch
              %206 = sbr.rel (%p204) target = $region51
            $region48: #{tpu_custom_call.1} parent=43 // loop_body
              %v210 = vld [vmem:[%s208] sm:%s201]
              %211 = vst [vmem:[%s209] sm:%s201] %v210
            $region49: #{tpu_custom_call.1} parent=43 // loop_footer
              %s207 = sadd.s32 1, %s203
            $region50: #{tpu_custom_call.1} parent=43 // loop_footer_branch
              %202 = sbr.rel target = $region46
            $region51: #{tpu_custom_call.1} parent=43 // loop_exit
              _
          $region44: #{tpu_custom_call.1} parent=35 // pred_fallthru
            _
          // Predicated region
          $region67: #{tpu_custom_call.1} parent=35 // pred_check
            _
          $region68: #{tpu_custom_call.1} parent=35 // pred_check_branch
            %233 = sbr.rel (0) target = $region70
          $region69: #{tpu_custom_call.1} parent=35 // pred_region
            %234 = vsyncadd [#allocation3], 128
          $region70: #{tpu_custom_call.1} parent=35 // pred_fallthru
            _
        $region36: #{tpu_custom_call.1} parent=31 // pred_fallthru
          _
        // Predicated region
        $region71: #{tpu_custom_call.1} parent=31 // pred_check
          %p235 = pneg %p176
        $region72: #{tpu_custom_call.1} parent=31 // pred_check_branch
          %237 = sbr.rel (%p235) target = $region74
        $region73: #{tpu_custom_call.1} parent=31 // pred_region
          %p238 = scmp.lt.s32.totalorder %s25, 0
          %s239 = ssub.s32 0, %s25
          %s240 = scalar_select %p238, %s239, %s25
          %s241 = sand.u32 %s240, 1
          %s242 = ssub.s32 0, %s241
          %s243 = scalar_select %p238, %s242, %s241
          %p244 = scmp.ne.s32.totalorder %s243, 0
          %p245 = scmp.lt.s32.totalorder %s243, 0
          %p246 = pnand %p245, %p244
          %p247 = pneg %p246
          %s248 = sadd.s32 %s243, 2
          %s249 = scalar_select %p247, %s248, %s243
          %s250 = smul.u32 %s25, 384
          %s251 = smul.u32 %s249, 4
          %s252 = smul.addr %s251, 2
          %s253 = scalar_lea.vmem [#allocation2], %s252
          %s254 = scalar_lea.sflag [#allocation3], %s249
          %s255 = smul.u32 2, 1
          %s256 = smul.u32 %s255, 4
          %s257 = sshll.u32 %s256, 4
          %258 = dma.done %s254, %s257
          %s259 = sadd.s32 %s25, 1
          %p260 = scmp.lt.s32.totalorder %s259, 1
          // Predicated region
          $region75: #{tpu_custom_call.1} parent=73 // pred_check
            %p261 = pneg %p260
          $region76: #{tpu_custom_call.1} parent=73 // pred_check_branch
            %263 = sbr.rel (%p261) target = $region78
          $region77: #{tpu_custom_call.1} parent=73 // pred_region
            %s264 = ssub.s32 1, %s249
            %s265 = smul.u32 %s259, 384
            %s266 = sshra.s32 %s265, 7
            %s267 = sand.u32 %s265, 127
            %s268 = smul.u32 %s23, 4
            %s269 = sadd.s32 %s266, %s268
            %s270 = smul.addr %s269, 2
            %s271 = scalar_lea.vmem %s0, %s270
            %s272 = smul.u32 %s264, 4
            %s273 = smul.addr %s272, 2
            %s274 = scalar_lea.vmem [#allocation2], %s273
            %s275 = scalar_lea.sflag [#allocation3], %s264
            %p277 = scmp.lt.u32.totalorder 8, 8
            %p278 = pneg %p277
            // Predicated region
            $region79: #{tpu_custom_call.1} parent=77 // pred_check
              _
            $region80: #{tpu_custom_call.1} parent=77 // pred_check_branch
              %280 = sbr.rel (%p277) target = $region82
            $region81: #{tpu_custom_call.1} parent=77 // pred_region
              %s296 = sand.u32 8, 7
              %p297 = scmp.eq.s32.totalorder %s296, 0
              // Predicated region
              $region94: #{tpu_custom_call.1} parent=81 // pred_check
                %p298 = pneg %p297
              $region95: #{tpu_custom_call.1} parent=81 // pred_check_branch
                %300 = sbr.rel (%p298) target = $region97
              $region96: #{tpu_custom_call.1} parent=81 // pred_region
                loop: start=0, step=1, limit=1
                $region98: #{tpu_custom_call.1} parent=96 // loop_pre_header
                  _
                $region99: #{tpu_custom_call.1} parent=96 // loop_header
                  %s302 = sphi 0, %s306
                  %p303 = scmp.ge.s32.totalorder %s302, 1
                  %s307 = sphi %s271, %s271
                  %s308 = sphi %s274, %s274
                $region100: #{tpu_custom_call.1} parent=96 // loop_header_branch
                  %305 = sbr.rel (%p303) target = $region104
                $region101: #{tpu_custom_call.1} parent=96 // loop_body
                  %v309 = vld [vmem:[%s307] sm:$0xff]
                  %310 = vst [vmem:[%s308] sm:$0xff] %v309
                $region102: #{tpu_custom_call.1} parent=96 // loop_footer
                  %s306 = sadd.s32 1, %s302
                $region103: #{tpu_custom_call.1} parent=96 // loop_footer_branch
                  %301 = sbr.rel target = $region99
                $region104: #{tpu_custom_call.1} parent=96 // loop_exit
                  _
              $region97: #{tpu_custom_call.1} parent=81 // pred_fallthru
                _
              %p311 = pneg %p297
              // Predicated region
              $region105: #{tpu_custom_call.1} parent=81 // pred_check
                _
              $region106: #{tpu_custom_call.1} parent=81 // pred_check_branch
                %313 = sbr.rel (%p297) target = $region108
              $region107: #{tpu_custom_call.1} parent=81 // pred_region
                %s314 = sand.u32 8, 7
              $region108: #{tpu_custom_call.1} parent=81 // pred_fallthru
                _
            $region82: #{tpu_custom_call.1} parent=77 // pred_fallthru
              _
            // Predicated region
            $region83: #{tpu_custom_call.1} parent=77 // pred_check
              %p281 = pneg %p277
            $region84: #{tpu_custom_call.1} parent=77 // pred_check_branch
              %283 = sbr.rel (%p281) target = $region86
            $region85: #{tpu_custom_call.1} parent=77 // pred_region
              %s284 = sshll.u32 1, 8
              %s285 = ssub.s32 %s284, 1
              loop: start=0, step=1, limit=1
              $region87: #{tpu_custom_call.1} parent=85 // loop_pre_header
                _
              $region88: #{tpu_custom_call.1} parent=85 // loop_header
                %s287 = sphi 0, %s291
                %p288 = scmp.ge.s32.totalorder %s287, 1
                %s292 = sphi %s271, %s271
                %s293 = sphi %s274, %s274
              $region89: #{tpu_custom_call.1} parent=85 // loop_header_branch
                %290 = sbr.rel (%p288) target = $region93
              $region90: #{tpu_custom_call.1} parent=85 // loop_body
                %v294 = vld [vmem:[%s292] sm:%s285]
                %295 = vst [vmem:[%s293] sm:%s285] %v294
              $region91: #{tpu_custom_call.1} parent=85 // loop_footer
                %s291 = sadd.s32 1, %s287
              $region92: #{tpu_custom_call.1} parent=85 // loop_footer_branch
                %286 = sbr.rel target = $region88
              $region93: #{tpu_custom_call.1} parent=85 // loop_exit
                _
            $region86: #{tpu_custom_call.1} parent=77 // pred_fallthru
              _
            // Predicated region
            $region109: #{tpu_custom_call.1} parent=77 // pred_check
              _
            $region110: #{tpu_custom_call.1} parent=77 // pred_check_branch
              %317 = sbr.rel (0) target = $region112
            $region111: #{tpu_custom_call.1} parent=77 // pred_region
              %318 = vsyncadd %s275, 128
            $region112: #{tpu_custom_call.1} parent=77 // pred_fallthru
              _
          $region78: #{tpu_custom_call.1} parent=73 // pred_fallthru
            _
          %v319 = vld [vmem:[%s253] sm:$0xff]
          %v320 = vld [vmem:[%s1] sm:$0x3]
          %s321 = scalar_lea.vmem %s1, 2
          %v322 = vld [vmem:[%s321] sm:$0x3]
          %v324 = vcombine.high %v319, %v319
          %v326 = vunpack.c.l.s4 1983009808
          %v327 = vunpack.c.0.s8 %v326
          %v328 = vlaneseq
          %v329 = vshrl.u32 %v328, 7
          %v330 = vsub.s32 %v327, %v329
          %v331 = vrot.slane %v319, %v330
          %v333 = vunpack.c.l.s4 1983009808
          %v334 = vunpack.c.0.s8 %v333
          %v335 = vlaneseq
          %v336 = vshrl.u32 %v335, 7
          %v337 = vsub.s32 %v334, %v336
          %v338 = vrot.slane %v324, %v337
          %v339 = vcombine.high %v331, %v331
          %v340 = vcombine.high %v338, %v338
          %341 = vrot.lane.b32.xlu0 %v331, 127
          %v342 = vpop.permute.xlu0 %341
          %343 = vrot.lane.b32.xlu0 %v339, 127
          %v344 = vpop.permute.xlu0 %343
          %345 = vrot.lane.b32.xlu0 %v338, 127
          %v346 = vpop.permute.xlu0 %345
          %347 = vrot.lane.b32.xlu0 %v340, 127
          %v348 = vpop.permute.xlu0 %347
          %vm349 = vcmask 1039360
          %v350 = vsel %vm349, %v342, %v344
          %v351 = vsel %vm349, %v344, %v346
          %v352 = vsel %vm349, %v346, %v348
          %vm353 = vcmask 31744
          %v355 = vsel %vm353, %v322, 0
          %vm357 = vcmask 1041408
          %v359 = vsel %vm357, %v350, 0
          %v362 = vsel %vm357, %v351, 0
          %v365 = vsel %vm357, %v352, 0
          %367 = vmatprep.subr.bf16.mxu0 0
          %368 = vmatpush1.bf16.msra.mxu0 0
          %369 = vmatprep.subr.bf16.mxu0 0
          %370 = vmatpush1.bf16.msra.mxu0 0
          %371 = vmatprep.subr.bf16.mxu0 0
          %372 = vmatpush1.bf16.msra.mxu0 0
          %373 = vmatprep.subr.bf16.mxu0 0
          %374 = vmatpush1.bf16.msra.mxu0 0
          %375 = vmatprep.subr.bf16.mxu0 0
          %376 = vmatpush1.bf16.msra.mxu0 0
          %377 = vmatprep.subr.bf16.mxu0 0
          %378 = vmatpush1.bf16.msra.mxu0 0
          %379 = vmatprep.subr.bf16.mxu0 0
          %380 = vmatpush1.bf16.msra.mxu0 0
          %381 = vmatprep.subr.bf16.mxu0 %v362
          %382 = vmatpush1.bf16.msra.mxu0 %v359
          %383 = vmatprep.subr.bf16.mxu0 0
          %384 = vmatpush2.bf16.msra.mxu0 0
          %385 = vmatprep.subr.bf16.mxu0 0
          %386 = vmatpush2.bf16.msra.mxu0 0
          %387 = vmatprep.subr.bf16.mxu0 0
          %388 = vmatpush2.bf16.msra.mxu0 0
          %389 = vmatprep.subr.bf16.mxu0 0
          %390 = vmatpush2.bf16.msra.mxu0 0
          %391 = vmatprep.subr.bf16.mxu0 0
          %392 = vmatpush2.bf16.msra.mxu0 0
          %393 = vmatprep.subr.bf16.mxu0 0
          %394 = vmatpush2.bf16.msra.mxu0 0
          %395 = vmatprep.subr.bf16.mxu0 0
          %396 = vmatpush2.bf16.msra.mxu0 0
          %397 = vmatprep.subr.bf16.mxu0 0
          %398 = vmatpush2.bf16.msra.mxu0 0
          %399 = vmatprep.mubr.bf16.mxu0 0
          %400 = vmatmul.mubr.bf16.gmra.mxu0 %v355
          %v401 = vpop.f32.mrf.mxu0
          %v402 = vadd.f32 0.0, %v401
          %v403 = vpop.f32.mrf.mxu0
          %v404 = vadd.f32 0.0, %v403
          %v405 = vpop.f32.mrf.mxu0
          %v406 = vpop.f32.mrf.mxu0
          %407 = vdwg.mxu0
          %408 = vmatprep.subr.bf16.mxu0 0
          %409 = vmatpush1.bf16.msra.mxu0 0
          %410 = vmatprep.subr.bf16.mxu0 0
          %411 = vmatpush1.bf16.msra.mxu0 0
          %412 = vmatprep.subr.bf16.mxu0 0
          %413 = vmatpush1.bf16.msra.mxu0 0
          %414 = vmatprep.subr.bf16.mxu0 0
          %415 = vmatpush1.bf16.msra.mxu0 0
          %416 = vmatprep.subr.bf16.mxu0 0
          %417 = vmatpush1.bf16.msra.mxu0 0
          %418 = vmatprep.subr.bf16.mxu0 0
          %419 = vmatpush1.bf16.msra.mxu0 0
          %420 = vmatprep.subr.bf16.mxu0 0
          %421 = vmatpush1.bf16.msra.mxu0 0
          %422 = vmatprep.subr.bf16.mxu0 0
          %423 = vmatpush1.bf16.msra.mxu0 %v365
          %424 = vmatprep.subr.bf16.mxu0 0
          %425 = vmatpush2.bf16.msra.mxu0 0
          %426 = vmatprep.subr.bf16.mxu0 0
          %427 = vmatpush2.bf16.msra.mxu0 0
          %428 = vmatprep.subr.bf16.mxu0 0
          %429 = vmatpush2.bf16.msra.mxu0 0
          %430 = vmatprep.subr.bf16.mxu0 0
          %431 = vmatpush2.bf16.msra.mxu0 0
          %432 = vmatprep.subr.bf16.mxu0 0
          %433 = vmatpush2.bf16.msra.mxu0 0
          %434 = vmatprep.subr.bf16.mxu0 0
          %435 = vmatpush2.bf16.msra.mxu0 0
          %436 = vmatprep.subr.bf16.mxu0 0
          %437 = vmatpush2.bf16.msra.mxu0 0
          %438 = vmatprep.subr.bf16.mxu0 0
          %439 = vmatpush2.bf16.msra.mxu0 0
          %440 = vmatprep.mubr.bf16.mxu0 0
          %441 = vmatmul.mubr.bf16.gmra.mxu0 %v355
          %v442 = vpop.f32.mrf.mxu0
          %v443 = vadd.f32 0.0, %v442
          %v444 = vpop.f32.mrf.mxu0
          %v445 = vpop.f32.mrf.mxu0
          %v446 = vpop.f32.mrf.mxu0
          %447 = vdwg.mxu0
          %v449 = vsel %vm353, %v320, 0
          %v452 = vsel %vm357, %v331, 0
          %v455 = vsel %vm357, %v339, 0
          %v458 = vsel %vm357, %v338, 0
          %460 = vmatprep.subr.bf16.mxu0 0
          %461 = vmatpush1.bf16.msra.mxu0 0
          %462 = vmatprep.subr.bf16.mxu0 0
          %463 = vmatpush1.bf16.msra.mxu0 0
          %464 = vmatprep.subr.bf16.mxu0 0
          %465 = vmatpush1.bf16.msra.mxu0 0
          %466 = vmatprep.subr.bf16.mxu0 0
          %467 = vmatpush1.bf16.msra.mxu0 0
          %468 = vmatprep.subr.bf16.mxu0 0
          %469 = vmatpush1.bf16.msra.mxu0 0
          %470 = vmatprep.subr.bf16.mxu0 0
          %471 = vmatpush1.bf16.msra.mxu0 0
          %472 = vmatprep.subr.bf16.mxu0 0
          %473 = vmatpush1.bf16.msra.mxu0 0
          %474 = vmatprep.subr.bf16.mxu0 %v455
          %475 = vmatpush1.bf16.msra.mxu0 %v452
          %476 = vmatprep.subr.bf16.mxu0 0
          %477 = vmatpush2.bf16.msra.mxu0 0
          %478 = vmatprep.subr.bf16.mxu0 0
          %479 = vmatpush2.bf16.msra.mxu0 0
          %480 = vmatprep.subr.bf16.mxu0 0
          %481 = vmatpush2.bf16.msra.mxu0 0
          %482 = vmatprep.subr.bf16.mxu0 0
          %483 = vmatpush2.bf16.msra.mxu0 0
          %484 = vmatprep.subr.bf16.mxu0 0
          %485 = vmatpush2.bf16.msra.mxu0 0
          %486 = vmatprep.subr.bf16.mxu0 0
          %487 = vmatpush2.bf16.msra.mxu0 0
          %488 = vmatprep.subr.bf16.mxu0 0
          %489 = vmatpush2.bf16.msra.mxu0 0
          %490 = vmatprep.subr.bf16.mxu0 0
          %491 = vmatpush2.bf16.msra.mxu0 0
          %492 = vmatprep.mubr.bf16.mxu0 0
          %493 = vmatmul.mubr.bf16.gmra.mxu0 %v449
          %v494 = vpop.f32.mrf.mxu0
          %v495 = vadd.f32 %v402, %v494
          %v496 = vpop.f32.mrf.mxu0
          %v497 = vadd.f32 %v404, %v496
          %v498 = vpop.f32.mrf.mxu0
          %v499 = vpop.f32.mrf.mxu0
          %500 = vdwg.mxu0
          %501 = vmatprep.subr.bf16.mxu0 0
          %502 = vmatpush1.bf16.msra.mxu0 0
          %503 = vmatprep.subr.bf16.mxu0 0
          %504 = vmatpush1.bf16.msra.mxu0 0
          %505 = vmatprep.subr.bf16.mxu0 0
          %506 = vmatpush1.bf16.msra.mxu0 0
          %507 = vmatprep.subr.bf16.mxu0 0
          %508 = vmatpush1.bf16.msra.mxu0 0
          %509 = vmatprep.subr.bf16.mxu0 0
          %510 = vmatpush1.bf16.msra.mxu0 0
          %511 = vmatprep.subr.bf16.mxu0 0
          %512 = vmatpush1.bf16.msra.mxu0 0
          %513 = vmatprep.subr.bf16.mxu0 0
          %514 = vmatpush1.bf16.msra.mxu0 0
          %515 = vmatprep.subr.bf16.mxu0 0
          %516 = vmatpush1.bf16.msra.mxu0 %v458
          %517 = vmatprep.subr.bf16.mxu0 0
          %518 = vmatpush2.bf16.msra.mxu0 0
          %519 = vmatprep.subr.bf16.mxu0 0
          %520 = vmatpush2.bf16.msra.mxu0 0
          %521 = vmatprep.subr.bf16.mxu0 0
          %522 = vmatpush2.bf16.msra.mxu0 0
          %523 = vmatprep.subr.bf16.mxu0 0
          %524 = vmatpush2.bf16.msra.mxu0 0
          %525 = vmatprep.subr.bf16.mxu0 0
          %526 = vmatpush2.bf16.msra.mxu0 0
          %527 = vmatprep.subr.bf16.mxu0 0
          %528 = vmatpush2.bf16.msra.mxu0 0
          %529 = vmatprep.subr.bf16.mxu0 0
          %530 = vmatpush2.bf16.msra.mxu0 0
          %531 = vmatprep.subr.bf16.mxu0 0
          %532 = vmatpush2.bf16.msra.mxu0 0
          %533 = vmatprep.mubr.bf16.mxu0 0
          %534 = vmatmul.mubr.bf16.gmra.mxu0 %v449
          %v535 = vpop.f32.mrf.mxu0
          %v536 = vadd.f32 %v443, %v535
          %v537 = vpop.f32.mrf.mxu0
          %v538 = vpop.f32.mrf.mxu0
          %v539 = vpop.f32.mrf.mxu0
          %540 = vdwg.mxu0
          %s541 = scalar_lea.vmem %s1, 4
          %v542 = vld [vmem:[%s541] sm:$0x3]
          %543 = vrot.lane.b32.xlu0 %v331, 126
          %v544 = vpop.permute.xlu0 %543
          %545 = vrot.lane.b32.xlu0 %v339, 126
          %v546 = vpop.permute.xlu0 %545
          %547 = vrot.lane.b32.xlu0 %v338, 126
          %v548 = vpop.permute.xlu0 %547
          %549 = vrot.lane.b32.xlu0 %v340, 126
          %v550 = vpop.permute.xlu0 %549
          %vm551 = vcmask 1031168
          %v552 = vsel %vm551, %v544, %v546
          %v553 = vsel %vm551, %v546, %v548
          %v554 = vsel %vm551, %v548, %v550
          %v556 = vsel %vm353, %v542, 0
          %v559 = vsel %vm357, %v552, 0
          %v562 = vsel %vm357, %v553, 0
          %v565 = vsel %vm357, %v554, 0
          %567 = vmatprep.subr.bf16.mxu0 0
          %568 = vmatpush1.bf16.msra.mxu0 0
          %569 = vmatprep.subr.bf16.mxu0 0
          %570 = vmatpush1.bf16.msra.mxu0 0
          %571 = vmatprep.subr.bf16.mxu0 0
          %572 = vmatpush1.bf16.msra.mxu0 0
          %573 = vmatprep.subr.bf16.mxu0 0
          %574 = vmatpush1.bf16.msra.mxu0 0
          %575 = vmatprep.subr.bf16.mxu0 0
          %576 = vmatpush1.bf16.msra.mxu0 0
          %577 = vmatprep.subr.bf16.mxu0 0
          %578 = vmatpush1.bf16.msra.mxu0 0
          %579 = vmatprep.subr.bf16.mxu0 0
          %580 = vmatpush1.bf16.msra.mxu0 0
          %581 = vmatprep.subr.bf16.mxu0 %v562
          %582 = vmatpush1.bf16.msra.mxu0 %v559
          %583 = vmatprep.subr.bf16.mxu0 0
          %584 = vmatpush2.bf16.msra.mxu0 0
          %585 = vmatprep.subr.bf16.mxu0 0
          %586 = vmatpush2.bf16.msra.mxu0 0
          %587 = vmatprep.subr.bf16.mxu0 0
          %588 = vmatpush2.bf16.msra.mxu0 0
          %589 = vmatprep.subr.bf16.mxu0 0
          %590 = vmatpush2.bf16.msra.mxu0 0
          %591 = vmatprep.subr.bf16.mxu0 0
          %592 = vmatpush2.bf16.msra.mxu0 0
          %593 = vmatprep.subr.bf16.mxu0 0
          %594 = vmatpush2.bf16.msra.mxu0 0
          %595 = vmatprep.subr.bf16.mxu0 0
          %596 = vmatpush2.bf16.msra.mxu0 0
          %597 = vmatprep.subr.bf16.mxu0 0
          %598 = vmatpush2.bf16.msra.mxu0 0
          %599 = vmatprep.mubr.bf16.mxu0 0
          %600 = vmatmul.mubr.bf16.gmra.mxu0 %v556
          %v601 = vpop.f32.mrf.mxu0
          %v602 = vadd.f32 0.0, %v601
          %v603 = vpop.f32.mrf.mxu0
          %v604 = vadd.f32 0.0, %v603
          %v605 = vpop.f32.mrf.mxu0
          %v606 = vpop.f32.mrf.mxu0
          %607 = vdwg.mxu0
          %608 = vmatprep.subr.bf16.mxu0 0
          %609 = vmatpush1.bf16.msra.mxu0 0
          %610 = vmatprep.subr.bf16.mxu0 0
          %611 = vmatpush1.bf16.msra.mxu0 0
          %612 = vmatprep.subr.bf16.mxu0 0
          %613 = vmatpush1.bf16.msra.mxu0 0
          %614 = vmatprep.subr.bf16.mxu0 0
          %615 = vmatpush1.bf16.msra.mxu0 0
          %616 = vmatprep.subr.bf16.mxu0 0
          %617 = vmatpush1.bf16.msra.mxu0 0
          %618 = vmatprep.subr.bf16.mxu0 0
          %619 = vmatpush1.bf16.msra.mxu0 0
          %620 = vmatprep.subr.bf16.mxu0 0
          %621 = vmatpush1.bf16.msra.mxu0 0
          %622 = vmatprep.subr.bf16.mxu0 0
          %623 = vmatpush1.bf16.msra.mxu0 %v565
          %624 = vmatprep.subr.bf16.mxu0 0
          %625 = vmatpush2.bf16.msra.mxu0 0
          %626 = vmatprep.subr.bf16.mxu0 0
          %627 = vmatpush2.bf16.msra.mxu0 0
          %628 = vmatprep.subr.bf16.mxu0 0
          %629 = vmatpush2.bf16.msra.mxu0 0
          %630 = vmatprep.subr.bf16.mxu0 0
          %631 = vmatpush2.bf16.msra.mxu0 0
          %632 = vmatprep.subr.bf16.mxu0 0
          %633 = vmatpush2.bf16.msra.mxu0 0
          %634 = vmatprep.subr.bf16.mxu0 0
          %635 = vmatpush2.bf16.msra.mxu0 0
          %636 = vmatprep.subr.bf16.mxu0 0
          %637 = vmatpush2.bf16.msra.mxu0 0
          %638 = vmatprep.subr.bf16.mxu0 0
          %639 = vmatpush2.bf16.msra.mxu0 0
          %640 = vmatprep.mubr.bf16.mxu0 0
          %641 = vmatmul.mubr.bf16.gmra.mxu0 %v556
          %v642 = vpop.f32.mrf.mxu0
          %v643 = vadd.f32 0.0, %v642
          %v644 = vpop.f32.mrf.mxu0
          %v645 = vpop.f32.mrf.mxu0
          %v646 = vpop.f32.mrf.mxu0
          %647 = vdwg.mxu0
          %v648 = vadd.f32 %v495, %v602
          %v649 = vadd.f32 %v497, %v604
          %v650 = vadd.f32 %v536, %v643
          %s651 = scalar_lea.vmem %s1, 6
          %v652 = vld [vmem:[%s651] sm:$0x3]
          %653 = vrot.lane.b32.xlu0 %v331, 104
          %v654 = vpop.permute.xlu0 %653
          %655 = vrot.lane.b32.xlu0 %v339, 104
          %v656 = vpop.permute.xlu0 %655
          %657 = vrot.lane.b32.xlu0 %v338, 104
          %v658 = vpop.permute.xlu0 %657
          %659 = vrot.lane.b32.xlu0 %v340, 104
          %v660 = vpop.permute.xlu0 %659
          %vm661 = vcmask 850944
          %v662 = vsel %vm661, %v654, %v656
          %v663 = vsel %vm661, %v656, %v658
          %v664 = vsel %vm661, %v658, %v660
          %v666 = vsel %vm353, %v652, 0
          %v669 = vsel %vm357, %v662, 0
          %v672 = vsel %vm357, %v663, 0
          %v675 = vsel %vm357, %v664, 0
          %677 = vmatprep.subr.bf16.mxu0 0
          %678 = vmatpush1.bf16.msra.mxu0 0
          %679 = vmatprep.subr.bf16.mxu0 0
          %680 = vmatpush1.bf16.msra.mxu0 0
          %681 = vmatprep.subr.bf16.mxu0 0
          %682 = vmatpush1.bf16.msra.mxu0 0
          %683 = vmatprep.subr.bf16.mxu0 0
          %684 = vmatpush1.bf16.msra.mxu0 0
          %685 = vmatprep.subr.bf16.mxu0 0
          %686 = vmatpush1.bf16.msra.mxu0 0
          %687 = vmatprep.subr.bf16.mxu0 0
          %688 = vmatpush1.bf16.msra.mxu0 0
          %689 = vmatprep.subr.bf16.mxu0 0
          %690 = vmatpush1.bf16.msra.mxu0 0
          %691 = vmatprep.subr.bf16.mxu0 %v672
          %692 = vmatpush1.bf16.msra.mxu0 %v669
          %693 = vmatprep.subr.bf16.mxu0 0
          %694 = vmatpush2.bf16.msra.mxu0 0
          %695 = vmatprep.subr.bf16.mxu0 0
          %696 = vmatpush2.bf16.msra.mxu0 0
          %697 = vmatprep.subr.bf16.mxu0 0
          %698 = vmatpush2.bf16.msra.mxu0 0
          %699 = vmatprep.subr.bf16.mxu0 0
          %700 = vmatpush2.bf16.msra.mxu0 0
          %701 = vmatprep.subr.bf16.mxu0 0
          %702 = vmatpush2.bf16.msra.mxu0 0
          %703 = vmatprep.subr.bf16.mxu0 0
          %704 = vmatpush2.bf16.msra.mxu0 0
          %705 = vmatprep.subr.bf16.mxu0 0
          %706 = vmatpush2.bf16.msra.mxu0 0
          %707 = vmatprep.subr.bf16.mxu0 0
          %708 = vmatpush2.bf16.msra.mxu0 0
          %709 = vmatprep.mubr.bf16.mxu0 0
          %710 = vmatmul.mubr.bf16.gmra.mxu0 %v666
          %v711 = vpop.f32.mrf.mxu0
          %v712 = vadd.f32 0.0, %v711
          %v713 = vpop.f32.mrf.mxu0
          %v714 = vadd.f32 0.0, %v713
          %v715 = vpop.f32.mrf.mxu0
          %v716 = vpop.f32.mrf.mxu0
          %717 = vdwg.mxu0
          %718 = vmatprep.subr.bf16.mxu0 0
          %719 = vmatpush1.bf16.msra.mxu0 0
          %720 = vmatprep.subr.bf16.mxu0 0
          %721 = vmatpush1.bf16.msra.mxu0 0
          %722 = vmatprep.subr.bf16.mxu0 0
          %723 = vmatpush1.bf16.msra.mxu0 0
          %724 = vmatprep.subr.bf16.mxu0 0
          %725 = vmatpush1.bf16.msra.mxu0 0
          %726 = vmatprep.subr.bf16.mxu0 0
          %727 = vmatpush1.bf16.msra.mxu0 0
          %728 = vmatprep.subr.bf16.mxu0 0
          %729 = vmatpush1.bf16.msra.mxu0 0
          %730 = vmatprep.subr.bf16.mxu0 0
          %731 = vmatpush1.bf16.msra.mxu0 0
          %732 = vmatprep.subr.bf16.mxu0 0
          %733 = vmatpush1.bf16.msra.mxu0 %v675
          %734 = vmatprep.subr.bf16.mxu0 0
          %735 = vmatpush2.bf16.msra.mxu0 0
          %736 = vmatprep.subr.bf16.mxu0 0
          %737 = vmatpush2.bf16.msra.mxu0 0
          %738 = vmatprep.subr.bf16.mxu0 0
          %739 = vmatpush2.bf16.msra.mxu0 0
          %740 = vmatprep.subr.bf16.mxu0 0
          %741 = vmatpush2.bf16.msra.mxu0 0
          %742 = vmatprep.subr.bf16.mxu0 0
          %743 = vmatpush2.bf16.msra.mxu0 0
          %744 = vmatprep.subr.bf16.mxu0 0
          %745 = vmatpush2.bf16.msra.mxu0 0
          %746 = vmatprep.subr.bf16.mxu0 0
          %747 = vmatpush2.bf16.msra.mxu0 0
          %748 = vmatprep.subr.bf16.mxu0 0
          %749 = vmatpush2.bf16.msra.mxu0 0
          %750 = vmatprep.mubr.bf16.mxu0 0
          %751 = vmatmul.mubr.bf16.gmra.mxu0 %v666
          %v752 = vpop.f32.mrf.mxu0
          %v753 = vadd.f32 0.0, %v752
          %v754 = vpop.f32.mrf.mxu0
          %v755 = vpop.f32.mrf.mxu0
          %v756 = vpop.f32.mrf.mxu0
          %757 = vdwg.mxu0
          %v758 = vadd.f32 %v648, %v712
          %v759 = vadd.f32 %v649, %v714
          %v760 = vadd.f32 %v650, %v753
          %s761 = scalar_lea.vmem %s1, 8
          %v762 = vld [vmem:[%s761] sm:$0x3]
          %763 = vrot.lane.b32.xlu0 %v331, 103
          %v764 = vpop.permute.xlu0 %763
          %765 = vrot.lane.b32.xlu0 %v339, 103
          %v766 = vpop.permute.xlu0 %765
          %767 = vrot.lane.b32.xlu0 %v338, 103
          %v768 = vpop.permute.xlu0 %767
          %769 = vrot.lane.b32.xlu0 %v340, 103
          %v770 = vpop.permute.xlu0 %769
          %vm771 = vcmask 842752
          %v772 = vsel %vm771, %v764, %v766
          %v773 = vsel %vm771, %v766, %v768
          %v774 = vsel %vm771, %v768, %v770
          %v776 = vsel %vm353, %v762, 0
          %v779 = vsel %vm357, %v772, 0
          %v782 = vsel %vm357, %v773, 0
          %v785 = vsel %vm357, %v774, 0
          %787 = vmatprep.subr.bf16.mxu0 0
          %788 = vmatpush1.bf16.msra.mxu0 0
          %789 = vmatprep.subr.bf16.mxu0 0
          %790 = vmatpush1.bf16.msra.mxu0 0
          %791 = vmatprep.subr.bf16.mxu0 0
          %792 = vmatpush1.bf16.msra.mxu0 0
          %793 = vmatprep.subr.bf16.mxu0 0
          %794 = vmatpush1.bf16.msra.mxu0 0
          %795 = vmatprep.subr.bf16.mxu0 0
          %796 = vmatpush1.bf16.msra.mxu0 0
          %797 = vmatprep.subr.bf16.mxu0 0
          %798 = vmatpush1.bf16.msra.mxu0 0
          %799 = vmatprep.subr.bf16.mxu0 0
          %800 = vmatpush1.bf16.msra.mxu0 0
          %801 = vmatprep.subr.bf16.mxu0 %v782
          %802 = vmatpush1.bf16.msra.mxu0 %v779
          %803 = vmatprep.subr.bf16.mxu0 0
          %804 = vmatpush2.bf16.msra.mxu0 0
          %805 = vmatprep.subr.bf16.mxu0 0
          %806 = vmatpush2.bf16.msra.mxu0 0
          %807 = vmatprep.subr.bf16.mxu0 0
          %808 = vmatpush2.bf16.msra.mxu0 0
          %809 = vmatprep.subr.bf16.mxu0 0
          %810 = vmatpush2.bf16.msra.mxu0 0
          %811 = vmatprep.subr.bf16.mxu0 0
          %812 = vmatpush2.bf16.msra.mxu0 0
          %813 = vmatprep.subr.bf16.mxu0 0
          %814 = vmatpush2.bf16.msra.mxu0 0
          %815 = vmatprep.subr.bf16.mxu0 0
          %816 = vmatpush2.bf16.msra.mxu0 0
          %817 = vmatprep.subr.bf16.mxu0 0
          %818 = vmatpush2.bf16.msra.mxu0 0
          %819 = vmatprep.mubr.bf16.mxu0 0
          %820 = vmatmul.mubr.bf16.gmra.mxu0 %v776
          %v821 = vpop.f32.mrf.mxu0
          %v822 = vadd.f32 0.0, %v821
          %v823 = vpop.f32.mrf.mxu0
          %v824 = vadd.f32 0.0, %v823
          %v825 = vpop.f32.mrf.mxu0
          %v826 = vpop.f32.mrf.mxu0
          %827 = vdwg.mxu0
          %828 = vmatprep.subr.bf16.mxu0 0
          %829 = vmatpush1.bf16.msra.mxu0 0
          %830 = vmatprep.subr.bf16.mxu0 0
          %831 = vmatpush1.bf16.msra.mxu0 0
          %832 = vmatprep.subr.bf16.mxu0 0
          %833 = vmatpush1.bf16.msra.mxu0 0
          %834 = vmatprep.subr.bf16.mxu0 0
          %835 = vmatpush1.bf16.msra.mxu0 0
          %836 = vmatprep.subr.bf16.mxu0 0
          %837 = vmatpush1.bf16.msra.mxu0 0
          %838 = vmatprep.subr.bf16.mxu0 0
          %839 = vmatpush1.bf16.msra.mxu0 0
          %840 = vmatprep.subr.bf16.mxu0 0
          %841 = vmatpush1.bf16.msra.mxu0 0
          %842 = vmatprep.subr.bf16.mxu0 0
          %843 = vmatpush1.bf16.msra.mxu0 %v785
          %844 = vmatprep.subr.bf16.mxu0 0
          %845 = vmatpush2.bf16.msra.mxu0 0
          %846 = vmatprep.subr.bf16.mxu0 0
          %847 = vmatpush2.bf16.msra.mxu0 0
          %848 = vmatprep.subr.bf16.mxu0 0
          %849 = vmatpush2.bf16.msra.mxu0 0
          %850 = vmatprep.subr.bf16.mxu0 0
          %851 = vmatpush2.bf16.msra.mxu0 0
          %852 = vmatprep.subr.bf16.mxu0 0
          %853 = vmatpush2.bf16.msra.mxu0 0
          %854 = vmatprep.subr.bf16.mxu0 0
          %855 = vmatpush2.bf16.msra.mxu0 0
          %856 = vmatprep.subr.bf16.mxu0 0
          %857 = vmatpush2.bf16.msra.mxu0 0
          %858 = vmatprep.subr.bf16.mxu0 0
          %859 = vmatpush2.bf16.msra.mxu0 0
          %860 = vmatprep.mubr.bf16.mxu0 0
          %861 = vmatmul.mubr.bf16.gmra.mxu0 %v776
          %v862 = vpop.f32.mrf.mxu0
          %v863 = vadd.f32 0.0, %v862
          %v864 = vpop.f32.mrf.mxu0
          %v865 = vpop.f32.mrf.mxu0
          %v866 = vpop.f32.mrf.mxu0
          %867 = vdwg.mxu0
          %v868 = vadd.f32 %v758, %v822
          %v869 = vadd.f32 %v759, %v824
          %v870 = vadd.f32 %v760, %v863
          %s871 = scalar_lea.vmem %s1, 10
          %v872 = vld [vmem:[%s871] sm:$0x3]
          %873 = vrot.lane.b32.xlu0 %v331, 102
          %v874 = vpop.permute.xlu0 %873
          %875 = vrot.lane.b32.xlu0 %v339, 102
          %v876 = vpop.permute.xlu0 %875
          %877 = vrot.lane.b32.xlu0 %v338, 102
          %v878 = vpop.permute.xlu0 %877
          %879 = vrot.lane.b32.xlu0 %v340, 102
          %v880 = vpop.permute.xlu0 %879
          %vm881 = vcmask 834560
          %v882 = vsel %vm881, %v874, %v876
          %v883 = vsel %vm881, %v876, %v878
          %v884 = vsel %vm881, %v878, %v880
          %v886 = vsel %vm353, %v872, 0
          %v889 = vsel %vm357, %v882, 0
          %v892 = vsel %vm357, %v883, 0
          %v895 = vsel %vm357, %v884, 0
          %897 = vmatprep.subr.bf16.mxu0 0
          %898 = vmatpush1.bf16.msra.mxu0 0
          %899 = vmatprep.subr.bf16.mxu0 0
          %900 = vmatpush1.bf16.msra.mxu0 0
          %901 = vmatprep.subr.bf16.mxu0 0
          %902 = vmatpush1.bf16.msra.mxu0 0
          %903 = vmatprep.subr.bf16.mxu0 0
          %904 = vmatpush1.bf16.msra.mxu0 0
          %905 = vmatprep.subr.bf16.mxu0 0
          %906 = vmatpush1.bf16.msra.mxu0 0
          %907 = vmatprep.subr.bf16.mxu0 0
          %908 = vmatpush1.bf16.msra.mxu0 0
          %909 = vmatprep.subr.bf16.mxu0 0
          %910 = vmatpush1.bf16.msra.mxu0 0
          %911 = vmatprep.subr.bf16.mxu0 %v892
          %912 = vmatpush1.bf16.msra.mxu0 %v889
          %913 = vmatprep.subr.bf16.mxu0 0
          %914 = vmatpush2.bf16.msra.mxu0 0
          %915 = vmatprep.subr.bf16.mxu0 0
          %916 = vmatpush2.bf16.msra.mxu0 0
          %917 = vmatprep.subr.bf16.mxu0 0
          %918 = vmatpush2.bf16.msra.mxu0 0
          %919 = vmatprep.subr.bf16.mxu0 0
          %920 = vmatpush2.bf16.msra.mxu0 0
          %921 = vmatprep.subr.bf16.mxu0 0
          %922 = vmatpush2.bf16.msra.mxu0 0
          %923 = vmatprep.subr.bf16.mxu0 0
          %924 = vmatpush2.bf16.msra.mxu0 0
          %925 = vmatprep.subr.bf16.mxu0 0
          %926 = vmatpush2.bf16.msra.mxu0 0
          %927 = vmatprep.subr.bf16.mxu0 0
          %928 = vmatpush2.bf16.msra.mxu0 0
          %929 = vmatprep.mubr.bf16.mxu0 0
          %930 = vmatmul.mubr.bf16.gmra.mxu0 %v886
          %v931 = vpop.f32.mrf.mxu0
          %v932 = vadd.f32 0.0, %v931
          %v933 = vpop.f32.mrf.mxu0
          %v934 = vadd.f32 0.0, %v933
          %v935 = vpop.f32.mrf.mxu0
          %v936 = vpop.f32.mrf.mxu0
          %937 = vdwg.mxu0
          %938 = vmatprep.subr.bf16.mxu0 0
          %939 = vmatpush1.bf16.msra.mxu0 0
          %940 = vmatprep.subr.bf16.mxu0 0
          %941 = vmatpush1.bf16.msra.mxu0 0
          %942 = vmatprep.subr.bf16.mxu0 0
          %943 = vmatpush1.bf16.msra.mxu0 0
          %944 = vmatprep.subr.bf16.mxu0 0
          %945 = vmatpush1.bf16.msra.mxu0 0
          %946 = vmatprep.subr.bf16.mxu0 0
          %947 = vmatpush1.bf16.msra.mxu0 0
          %948 = vmatprep.subr.bf16.mxu0 0
          %949 = vmatpush1.bf16.msra.mxu0 0
          %950 = vmatprep.subr.bf16.mxu0 0
          %951 = vmatpush1.bf16.msra.mxu0 0
          %952 = vmatprep.subr.bf16.mxu0 0
          %953 = vmatpush1.bf16.msra.mxu0 %v895
          %954 = vmatprep.subr.bf16.mxu0 0
          %955 = vmatpush2.bf16.msra.mxu0 0
          %956 = vmatprep.subr.bf16.mxu0 0
          %957 = vmatpush2.bf16.msra.mxu0 0
          %958 = vmatprep.subr.bf16.mxu0 0
          %959 = vmatpush2.bf16.msra.mxu0 0
          %960 = vmatprep.subr.bf16.mxu0 0
          %961 = vmatpush2.bf16.msra.mxu0 0
          %962 = vmatprep.subr.bf16.mxu0 0
          %963 = vmatpush2.bf16.msra.mxu0 0
          %964 = vmatprep.subr.bf16.mxu0 0
          %965 = vmatpush2.bf16.msra.mxu0 0
          %966 = vmatprep.subr.bf16.mxu0 0
          %967 = vmatpush2.bf16.msra.mxu0 0
          %968 = vmatprep.subr.bf16.mxu0 0
          %969 = vmatpush2.bf16.msra.mxu0 0
          %970 = vmatprep.mubr.bf16.mxu0 0
          %971 = vmatmul.mubr.bf16.gmra.mxu0 %v886
          %v972 = vpop.f32.mrf.mxu0
          %v973 = vadd.f32 0.0, %v972
          %v974 = vpop.f32.mrf.mxu0
          %v975 = vpop.f32.mrf.mxu0
          %v976 = vpop.f32.mrf.mxu0
          %977 = vdwg.mxu0
          %v978 = vadd.f32 %v868, %v932
          %v979 = vadd.f32 %v869, %v934
          %v980 = vadd.f32 %v870, %v973
          %s981 = scalar_lea.vmem %s1, 12
          %v982 = vld [vmem:[%s981] sm:$0x3]
          %983 = vrot.lane.b32.xlu0 %v331, 80
          %v984 = vpop.permute.xlu0 %983
          %985 = vrot.lane.b32.xlu0 %v339, 80
          %v986 = vpop.permute.xlu0 %985
          %987 = vrot.lane.b32.xlu0 %v338, 80
          %v988 = vpop.permute.xlu0 %987
          %989 = vrot.lane.b32.xlu0 %v340, 80
          %v990 = vpop.permute.xlu0 %989
          %vm991 = vcmask 654336
          %v992 = vsel %vm991, %v984, %v986
          %v993 = vsel %vm991, %v986, %v988
          %v994 = vsel %vm991, %v988, %v990
          %v996 = vsel %vm353, %v982, 0
          %v999 = vsel %vm357, %v992, 0
          %v1002 = vsel %vm357, %v993, 0
          %v1005 = vsel %vm357, %v994, 0
          %1007 = vmatprep.subr.bf16.mxu0 0
          %1008 = vmatpush1.bf16.msra.mxu0 0
          %1009 = vmatprep.subr.bf16.mxu0 0
          %1010 = vmatpush1.bf16.msra.mxu0 0
          %1011 = vmatprep.subr.bf16.mxu0 0
          %1012 = vmatpush1.bf16.msra.mxu0 0
          %1013 = vmatprep.subr.bf16.mxu0 0
          %1014 = vmatpush1.bf16.msra.mxu0 0
          %1015 = vmatprep.subr.bf16.mxu0 0
          %1016 = vmatpush1.bf16.msra.mxu0 0
          %1017 = vmatprep.subr.bf16.mxu0 0
          %1018 = vmatpush1.bf16.msra.mxu0 0
          %1019 = vmatprep.subr.bf16.mxu0 0
          %1020 = vmatpush1.bf16.msra.mxu0 0
          %1021 = vmatprep.subr.bf16.mxu0 %v1002
          %1022 = vmatpush1.bf16.msra.mxu0 %v999
          %1023 = vmatprep.subr.bf16.mxu0 0
          %1024 = vmatpush2.bf16.msra.mxu0 0
          %1025 = vmatprep.subr.bf16.mxu0 0
          %1026 = vmatpush2.bf16.msra.mxu0 0
          %1027 = vmatprep.subr.bf16.mxu0 0
          %1028 = vmatpush2.bf16.msra.mxu0 0
          %1029 = vmatprep.subr.bf16.mxu0 0
          %1030 = vmatpush2.bf16.msra.mxu0 0
          %1031 = vmatprep.subr.bf16.mxu0 0
          %1032 = vmatpush2.bf16.msra.mxu0 0
          %1033 = vmatprep.subr.bf16.mxu0 0
          %1034 = vmatpush2.bf16.msra.mxu0 0
          %1035 = vmatprep.subr.bf16.mxu0 0
          %1036 = vmatpush2.bf16.msra.mxu0 0
          %1037 = vmatprep.subr.bf16.mxu0 0
          %1038 = vmatpush2.bf16.msra.mxu0 0
          %1039 = vmatprep.mubr.bf16.mxu0 0
          %1040 = vmatmul.mubr.bf16.gmra.mxu0 %v996
          %v1041 = vpop.f32.mrf.mxu0
          %v1042 = vadd.f32 0.0, %v1041
          %v1043 = vpop.f32.mrf.mxu0
          %v1044 = vadd.f32 0.0, %v1043
          %v1045 = vpop.f32.mrf.mxu0
          %v1046 = vpop.f32.mrf.mxu0
          %1047 = vdwg.mxu0
          %1048 = vmatprep.subr.bf16.mxu0 0
          %1049 = vmatpush1.bf16.msra.mxu0 0
          %1050 = vmatprep.subr.bf16.mxu0 0
          %1051 = vmatpush1.bf16.msra.mxu0 0
          %1052 = vmatprep.subr.bf16.mxu0 0
          %1053 = vmatpush1.bf16.msra.mxu0 0
          %1054 = vmatprep.subr.bf16.mxu0 0
          %1055 = vmatpush1.bf16.msra.mxu0 0
          %1056 = vmatprep.subr.bf16.mxu0 0
          %1057 = vmatpush1.bf16.msra.mxu0 0
          %1058 = vmatprep.subr.bf16.mxu0 0
          %1059 = vmatpush1.bf16.msra.mxu0 0
          %1060 = vmatprep.subr.bf16.mxu0 0
          %1061 = vmatpush1.bf16.msra.mxu0 0
          %1062 = vmatprep.subr.bf16.mxu0 0
          %1063 = vmatpush1.bf16.msra.mxu0 %v1005
          %1064 = vmatprep.subr.bf16.mxu0 0
          %1065 = vmatpush2.bf16.msra.mxu0 0
          %1066 = vmatprep.subr.bf16.mxu0 0
          %1067 = vmatpush2.bf16.msra.mxu0 0
          %1068 = vmatprep.subr.bf16.mxu0 0
          %1069 = vmatpush2.bf16.msra.mxu0 0
          %1070 = vmatprep.subr.bf16.mxu0 0
          %1071 = vmatpush2.bf16.msra.mxu0 0
          %1072 = vmatprep.subr.bf16.mxu0 0
          %1073 = vmatpush2.bf16.msra.mxu0 0
          %1074 = vmatprep.subr.bf16.mxu0 0
          %1075 = vmatpush2.bf16.msra.mxu0 0
          %1076 = vmatprep.subr.bf16.mxu0 0
          %1077 = vmatpush2.bf16.msra.mxu0 0
          %1078 = vmatprep.subr.bf16.mxu0 0
          %1079 = vmatpush2.bf16.msra.mxu0 0
          %1080 = vmatprep.mubr.bf16.mxu0 0
          %1081 = vmatmul.mubr.bf16.gmra.mxu0 %v996
          %v1082 = vpop.f32.mrf.mxu0
          %v1083 = vadd.f32 0.0, %v1082
          %v1084 = vpop.f32.mrf.mxu0
          %v1085 = vpop.f32.mrf.mxu0
          %v1086 = vpop.f32.mrf.mxu0
          %1087 = vdwg.mxu0
          %v1088 = vadd.f32 %v978, %v1042
          %v1089 = vadd.f32 %v979, %v1044
          %v1090 = vadd.f32 %v980, %v1083
          %s1091 = scalar_lea.vmem %s1, 14
          %v1092 = vld [vmem:[%s1091] sm:$0x3]
          %1093 = vrot.lane.b32.xlu0 %v331, 79
          %v1094 = vpop.permute.xlu0 %1093
          %1095 = vrot.lane.b32.xlu0 %v339, 79
          %v1096 = vpop.permute.xlu0 %1095
          %1097 = vrot.lane.b32.xlu0 %v338, 79
          %v1098 = vpop.permute.xlu0 %1097
          %1099 = vrot.lane.b32.xlu0 %v340, 79
          %v1100 = vpop.permute.xlu0 %1099
          %vm1101 = vcmask 646144
          %v1102 = vsel %vm1101, %v1094, %v1096
          %v1103 = vsel %vm1101, %v1096, %v1098
          %v1104 = vsel %vm1101, %v1098, %v1100
          %v1106 = vsel %vm353, %v1092, 0
          %v1109 = vsel %vm357, %v1102, 0
          %v1112 = vsel %vm357, %v1103, 0
          %v1115 = vsel %vm357, %v1104, 0
          %1117 = vmatprep.subr.bf16.mxu0 0
          %1118 = vmatpush1.bf16.msra.mxu0 0
          %1119 = vmatprep.subr.bf16.mxu0 0
          %1120 = vmatpush1.bf16.msra.mxu0 0
          %1121 = vmatprep.subr.bf16.mxu0 0
          %1122 = vmatpush1.bf16.msra.mxu0 0
          %1123 = vmatprep.subr.bf16.mxu0 0
          %1124 = vmatpush1.bf16.msra.mxu0 0
          %1125 = vmatprep.subr.bf16.mxu0 0
          %1126 = vmatpush1.bf16.msra.mxu0 0
          %1127 = vmatprep.subr.bf16.mxu0 0
          %1128 = vmatpush1.bf16.msra.mxu0 0
          %1129 = vmatprep.subr.bf16.mxu0 0
          %1130 = vmatpush1.bf16.msra.mxu0 0
          %1131 = vmatprep.subr.bf16.mxu0 %v1112
          %1132 = vmatpush1.bf16.msra.mxu0 %v1109
          %1133 = vmatprep.subr.bf16.mxu0 0
          %1134 = vmatpush2.bf16.msra.mxu0 0
          %1135 = vmatprep.subr.bf16.mxu0 0
          %1136 = vmatpush2.bf16.msra.mxu0 0
          %1137 = vmatprep.subr.bf16.mxu0 0
          %1138 = vmatpush2.bf16.msra.mxu0 0
          %1139 = vmatprep.subr.bf16.mxu0 0
          %1140 = vmatpush2.bf16.msra.mxu0 0
          %1141 = vmatprep.subr.bf16.mxu0 0
          %1142 = vmatpush2.bf16.msra.mxu0 0
          %1143 = vmatprep.subr.bf16.mxu0 0
          %1144 = vmatpush2.bf16.msra.mxu0 0
          %1145 = vmatprep.subr.bf16.mxu0 0
          %1146 = vmatpush2.bf16.msra.mxu0 0
          %1147 = vmatprep.subr.bf16.mxu0 0
          %1148 = vmatpush2.bf16.msra.mxu0 0
          %1149 = vmatprep.mubr.bf16.mxu0 0
          %1150 = vmatmul.mubr.bf16.gmra.mxu0 %v1106
          %v1151 = vpop.f32.mrf.mxu0
          %v1152 = vadd.f32 0.0, %v1151
          %v1153 = vpop.f32.mrf.mxu0
          %v1154 = vadd.f32 0.0, %v1153
          %v1155 = vpop.f32.mrf.mxu0
          %v1156 = vpop.f32.mrf.mxu0
          %1157 = vdwg.mxu0
          %1158 = vmatprep.subr.bf16.mxu0 0
          %1159 = vmatpush1.bf16.msra.mxu0 0
          %1160 = vmatprep.subr.bf16.mxu0 0
          %1161 = vmatpush1.bf16.msra.mxu0 0
          %1162 = vmatprep.subr.bf16.mxu0 0
          %1163 = vmatpush1.bf16.msra.mxu0 0
          %1164 = vmatprep.subr.bf16.mxu0 0
          %1165 = vmatpush1.bf16.msra.mxu0 0
          %1166 = vmatprep.subr.bf16.mxu0 0
          %1167 = vmatpush1.bf16.msra.mxu0 0
          %1168 = vmatprep.subr.bf16.mxu0 0
          %1169 = vmatpush1.bf16.msra.mxu0 0
          %1170 = vmatprep.subr.bf16.mxu0 0
          %1171 = vmatpush1.bf16.msra.mxu0 0
          %1172 = vmatprep.subr.bf16.mxu0 0
          %1173 = vmatpush1.bf16.msra.mxu0 %v1115
          %1174 = vmatprep.subr.bf16.mxu0 0
          %1175 = vmatpush2.bf16.msra.mxu0 0
          %1176 = vmatprep.subr.bf16.mxu0 0
          %1177 = vmatpush2.bf16.msra.mxu0 0
          %1178 = vmatprep.subr.bf16.mxu0 0
          %1179 = vmatpush2.bf16.msra.mxu0 0
          %1180 = vmatprep.subr.bf16.mxu0 0
          %1181 = vmatpush2.bf16.msra.mxu0 0
          %1182 = vmatprep.subr.bf16.mxu0 0
          %1183 = vmatpush2.bf16.msra.mxu0 0
          %1184 = vmatprep.subr.bf16.mxu0 0
          %1185 = vmatpush2.bf16.msra.mxu0 0
          %1186 = vmatprep.subr.bf16.mxu0 0
          %1187 = vmatpush2.bf16.msra.mxu0 0
          %1188 = vmatprep.subr.bf16.mxu0 0
          %1189 = vmatpush2.bf16.msra.mxu0 0
          %1190 = vmatprep.mubr.bf16.mxu0 0
          %1191 = vmatmul.mubr.bf16.gmra.mxu0 %v1106
          %v1192 = vpop.f32.mrf.mxu0
          %v1193 = vadd.f32 0.0, %v1192
          %v1194 = vpop.f32.mrf.mxu0
          %v1195 = vpop.f32.mrf.mxu0
          %v1196 = vpop.f32.mrf.mxu0
          %1197 = vdwg.mxu0
          %v1198 = vadd.f32 %v1088, %v1152
          %v1199 = vadd.f32 %v1089, %v1154
          %v1200 = vadd.f32 %v1090, %v1193
          %s1201 = scalar_lea.vmem %s1, 16
          %v1202 = vld [vmem:[%s1201] sm:$0x3]
          %1203 = vrot.lane.b32.xlu0 %v331, 78
          %v1204 = vpop.permute.xlu0 %1203
          %1205 = vrot.lane.b32.xlu0 %v339, 78
          %v1206 = vpop.permute.xlu0 %1205
          %1207 = vrot.lane.b32.xlu0 %v338, 78
          %v1208 = vpop.permute.xlu0 %1207
          %1209 = vrot.lane.b32.xlu0 %v340, 78
          %v1210 = vpop.permute.xlu0 %1209
          %vm1211 = vcmask 637952
          %v1212 = vsel %vm1211, %v1204, %v1206
          %v1213 = vsel %vm1211, %v1206, %v1208
          %v1214 = vsel %vm1211, %v1208, %v1210
          %v1216 = vsel %vm353, %v1202, 0
          %v1219 = vsel %vm357, %v1212, 0
          %v1222 = vsel %vm357, %v1213, 0
          %v1225 = vsel %vm357, %v1214, 0
          %1227 = vmatprep.subr.bf16.mxu0 0
          %1228 = vmatpush1.bf16.msra.mxu0 0
          %1229 = vmatprep.subr.bf16.mxu0 0
          %1230 = vmatpush1.bf16.msra.mxu0 0
          %1231 = vmatprep.subr.bf16.mxu0 0
          %1232 = vmatpush1.bf16.msra.mxu0 0
          %1233 = vmatprep.subr.bf16.mxu0 0
          %1234 = vmatpush1.bf16.msra.mxu0 0
          %1235 = vmatprep.subr.bf16.mxu0 0
          %1236 = vmatpush1.bf16.msra.mxu0 0
          %1237 = vmatprep.subr.bf16.mxu0 0
          %1238 = vmatpush1.bf16.msra.mxu0 0
          %1239 = vmatprep.subr.bf16.mxu0 0
          %1240 = vmatpush1.bf16.msra.mxu0 0
          %1241 = vmatprep.subr.bf16.mxu0 %v1222
          %1242 = vmatpush1.bf16.msra.mxu0 %v1219
          %1243 = vmatprep.subr.bf16.mxu0 0
          %1244 = vmatpush2.bf16.msra.mxu0 0
          %1245 = vmatprep.subr.bf16.mxu0 0
          %1246 = vmatpush2.bf16.msra.mxu0 0
          %1247 = vmatprep.subr.bf16.mxu0 0
          %1248 = vmatpush2.bf16.msra.mxu0 0
          %1249 = vmatprep.subr.bf16.mxu0 0
          %1250 = vmatpush2.bf16.msra.mxu0 0
          %1251 = vmatprep.subr.bf16.mxu0 0
          %1252 = vmatpush2.bf16.msra.mxu0 0
          %1253 = vmatprep.subr.bf16.mxu0 0
          %1254 = vmatpush2.bf16.msra.mxu0 0
          %1255 = vmatprep.subr.bf16.mxu0 0
          %1256 = vmatpush2.bf16.msra.mxu0 0
          %1257 = vmatprep.subr.bf16.mxu0 0
          %1258 = vmatpush2.bf16.msra.mxu0 0
          %1259 = vmatprep.mubr.bf16.mxu0 0
          %1260 = vmatmul.mubr.bf16.gmra.mxu0 %v1216
          %v1261 = vpop.f32.mrf.mxu0
          %v1262 = vadd.f32 0.0, %v1261
          %v1263 = vpop.f32.mrf.mxu0
          %v1264 = vadd.f32 0.0, %v1263
          %v1265 = vpop.f32.mrf.mxu0
          %v1266 = vpop.f32.mrf.mxu0
          %1267 = vdwg.mxu0
          %1268 = vmatprep.subr.bf16.mxu0 0
          %1269 = vmatpush1.bf16.msra.mxu0 0
          %1270 = vmatprep.subr.bf16.mxu0 0
          %1271 = vmatpush1.bf16.msra.mxu0 0
          %1272 = vmatprep.subr.bf16.mxu0 0
          %1273 = vmatpush1.bf16.msra.mxu0 0
          %1274 = vmatprep.subr.bf16.mxu0 0
          %1275 = vmatpush1.bf16.msra.mxu0 0
          %1276 = vmatprep.subr.bf16.mxu0 0
          %1277 = vmatpush1.bf16.msra.mxu0 0
          %1278 = vmatprep.subr.bf16.mxu0 0
          %1279 = vmatpush1.bf16.msra.mxu0 0
          %1280 = vmatprep.subr.bf16.mxu0 0
          %1281 = vmatpush1.bf16.msra.mxu0 0
          %1282 = vmatprep.subr.bf16.mxu0 0
          %1283 = vmatpush1.bf16.msra.mxu0 %v1225
          %1284 = vmatprep.subr.bf16.mxu0 0
          %1285 = vmatpush2.bf16.msra.mxu0 0
          %1286 = vmatprep.subr.bf16.mxu0 0
          %1287 = vmatpush2.bf16.msra.mxu0 0
          %1288 = vmatprep.subr.bf16.mxu0 0
          %1289 = vmatpush2.bf16.msra.mxu0 0
          %1290 = vmatprep.subr.bf16.mxu0 0
          %1291 = vmatpush2.bf16.msra.mxu0 0
          %1292 = vmatprep.subr.bf16.mxu0 0
          %1293 = vmatpush2.bf16.msra.mxu0 0
          %1294 = vmatprep.subr.bf16.mxu0 0
          %1295 = vmatpush2.bf16.msra.mxu0 0
          %1296 = vmatprep.subr.bf16.mxu0 0
          %1297 = vmatpush2.bf16.msra.mxu0 0
          %1298 = vmatprep.subr.bf16.mxu0 0
          %1299 = vmatpush2.bf16.msra.mxu0 0
          %1300 = vmatprep.mubr.bf16.mxu0 0
          %1301 = vmatmul.mubr.bf16.gmra.mxu0 %v1216
          %v1302 = vpop.f32.mrf.mxu0
          %v1303 = vadd.f32 0.0, %v1302
          %v1304 = vpop.f32.mrf.mxu0
          %v1305 = vpop.f32.mrf.mxu0
          %v1306 = vpop.f32.mrf.mxu0
          %1307 = vdwg.mxu0
          %v1308 = vadd.f32 %v1198, %v1262
          %v1309 = vadd.f32 %v1199, %v1264
          %v1310 = vadd.f32 %v1200, %v1303
          %v1311 = vld [vmem:[%s2] sm:$0xf]
          %1313 = vset.pattern.permute.xlu0 0
          %1314 = vperm.xlu0 %1313, %v1311
          %v1315 = vpop.permute.xlu0 %1314
          %v1317 = vadd.f32 %v1308, %v1315
          %v1318 = vadd.f32 %v1309, %v1315
          %v1319 = vadd.f32 %v1310, %v1315
          %v1322 = vcombine.low %v1317, %v1318
          %s1324 = smul.u32 %s25, 3
          %s1325 = smul.addr %s1324, 4
          %s1326 = scalar_lea.vmem [#allocation4], %s1325
          %1327 = vst [vmem:[%s1326] sm:$0xff] %v1322
          %1328 = vst [vmem:[%s1326 + $0x8] sm:$0xf] %v1319
          %1329 = vrot.lane.b32.xlu0 %v319, 103
          %v1330 = vpop.permute.xlu0 %1329
          %v1331 = vrot.slane %v1330, 2
          %v1332 = vsel %vm771, %v1330, %v1331
          %s1334 = smul.addr %s1324, 2
          %s1335 = scalar_lea.vmem [#allocation5], %s1334
          %1336 = vst [vmem:[%s1335] sm:$0x3f] %v1332
          %v1337 = vld [vmem:[%s3] sm:$0x7]
          %v1339 = vlaneseq
          %v1340 = vshrl.u32 %v1339, 7
          %v1341 = vsub.s32 0, %v1340
          %v1342 = vrot.slane %v1337, %v1341
          %v1343 = vlaneseq
          %v1344 = vshrl.u32 %v1343, 7
          %v1345 = vsub.s32 1, %v1344
          %v1346 = vrot.slane %v1337, %v1345
          %v1347 = vlaneseq
          %v1348 = vshrl.u32 %v1347, 7
          %v1349 = vsub.s32 2, %v1348
          %v1350 = vrot.slane %v1337, %v1349
          %v1354 = vmul.f32 %v1317, %v1342
          %v1355 = vmul.f32 %v1318, %v1346
          %v1356 = vmul.f32 %v1319, %v1350
          %v1357 = vld [vmem:[#allocation6] sm:$0xf]
          %vm1358 = vcmask 1043456
          %v1359 = vsel %vm1358, %v1354, 0.0
          %v1360 = vsel %vm1358, %v1355, 0.0
          %v1361 = vadd.f32 %v1359, %v1360
          %v1362 = vsel %vm1358, %v1356, 0.0
          %v1363 = vadd.f32 %v1361, %v1362
          %1364 = vadd.xlane.f32.xlu0 %v1363
          %v1365 = vpop.xlane.xlu0 %1364
          %v1366 = vadd.f32 %v1357, %v1365
          %vm1367 = vcmask 3072
          %1368 = vst.msk [vmem:[#allocation6] sm:$0xf] %vm1367, %v1366
          %v1369 = vld [vmem:[#allocation7] sm:$0xf]
          %v1370 = vmul.f32 %v1354, %v1317
          %v1371 = vmul.f32 %v1355, %v1318
          %v1372 = vmul.f32 %v1356, %v1319
          %v1373 = vsel %vm1358, %v1370, 0.0
          %v1374 = vsel %vm1358, %v1371, 0.0
          %v1375 = vadd.f32 %v1373, %v1374
          %v1376 = vsel %vm1358, %v1372, 0.0
          %v1377 = vadd.f32 %v1375, %v1376
          %1378 = vadd.xlane.f32.xlu0 %v1377
          %v1379 = vpop.xlane.xlu0 %1378
          %v1380 = vadd.f32 %v1369, %v1379
          %1381 = vst.msk [vmem:[#allocation7] sm:$0xf] %vm1367, %v1380
        $region74: #{tpu_custom_call.1} parent=31 // pred_fallthru
          _
        %p1382 = scmp.eq.s32.totalorder %s24, 1
        // Predicated region
        $region113: #{tpu_custom_call.1} parent=31 // pred_check
          %p1383 = pneg %p1382
        $region114: #{tpu_custom_call.1} parent=31 // pred_check_branch
          %1385 = sbr.rel (%p1383) target = $region116
        $region115: #{tpu_custom_call.1} parent=31 // pred_region
          %v1386 = vld [vmem:[#allocation6] sm:$0xf]
          %v1387 = vmul.f32 %v1386, 0.00390625
          %v1388 = vld [vmem:[#allocation7] sm:$0xf]
          %v1389 = vmul.f32 %v1388, 0.00390625
          %v1390 = vmul.f32 %v1387, %v1387
          %v1391 = vsub.f32 %v1389, %v1390
          %v1392 = vadd.f32 %v1391, 1e-05
          %v1393 = vrsqrt.pop %v1392
          %s1394 = smul.u32 %s25, 3
          %s1395 = smul.addr %s1394, 4
          %s1396 = scalar_lea.vmem [#allocation4], %s1395
          %v1397 = vld [vmem:[%s1396] sm:$0xff]
          %v1398 = vld [vmem:[%s1396 + $0x8] sm:$0xf]
          %s1399 = smul.addr %s1394, 2
          %s1400 = scalar_lea.vmem [#allocation5], %s1399
          %v1401 = vld [vmem:[%s1400] sm:$0x3f]
          %v1402 = vunpack.c.l.bf16 %v1401
          %v1403 = vunpack.c.h.bf16 %v1401
          %1405 = vset.pattern.permute.xlu0 0
          %1406 = vperm.xlu0 %1405, %v1387
          %v1407 = vpop.permute.xlu0 %1406
          %v1409 = vunpack.c.l.s4 839922192
          %v1410 = vunpack.c.0.s8 %v1409
          %v1411 = vlaneseq
          %v1412 = vshrl.u32 %v1411, 7
          %v1413 = vsub.s32 %v1410, %v1412
          %v1414 = vrot.slane %v1407, %v1413
          %v1416 = vsub.f32 %v1397, %v1414
          %v1417 = vsub.f32 %v1398, %v1414
          %1419 = vset.pattern.permute.xlu0 0
          %1420 = vperm.xlu0 %1419, %v1393
          %v1421 = vpop.permute.xlu0 %1420
          %v1423 = vunpack.c.l.s4 839922192
          %v1424 = vunpack.c.0.s8 %v1423
          %v1425 = vlaneseq
          %v1426 = vshrl.u32 %v1425, 7
          %v1427 = vsub.s32 %v1424, %v1426
          %v1428 = vrot.slane %v1421, %v1427
          %v1430 = vmul.f32 %v1416, %v1428
          %v1431 = vmul.f32 %v1417, %v1428
          %v1432 = vadd.f32 %v1402, %v1430
          %v1433 = vadd.f32 %v1403, %v1431
          %1434 = vst [vmem:[%s172] sm:$0xff] %v1432
          %1435 = vst [vmem:[%s172 + $0x8] sm:$0xf] %v1433
        $region116: #{tpu_custom_call.1} parent=31 // pred_fallthru
          _
        %s1436 = sand.u32 %s112, 1
        %s1437 = scalar_lea.sflag [#allocation9], %s1436
        %s1438 = sand.u32 %s112, 1
        %s1439 = smul.addr %s1438, 12
        %s1440 = scalar_lea.vmem [#allocation8], %s1439
        // Predicated region
        $region117: #{tpu_custom_call.1} parent=31 // pred_check
          %p1441 = pneg %p122
        $region118: #{tpu_custom_call.1} parent=31 // pred_check_branch
          %1443 = sbr.rel (%p1441) target = $region120
        $region119: #{tpu_custom_call.1} parent=31 // pred_region
          %s1444 = smul.u32 %s25, %s24
          %s1445 = smul.u32 3, %s1444
          %s1447 = ssub.s32 192, 192
          %1448 = vsyncadd %s1437, %s1447
          %s1449 = smul.addr %s23, 3
          %s1450 = sadd.s32 %s1445, %s1449
          %s1451 = smul.addr %s1450, 64
          %s1452 = scalar_lea.hbm %s4, %s1451
          %s1454 = sshll.u32 %s1440, 4
          %s1455 = int_to_ptr.vmem [resolvable:$true] %s1454
          %1457 = dma.vmem_to_hbm [thread:$0]  %s1455, 192, %s1452, %s1437
        $region120: #{tpu_custom_call.1} parent=31 // pred_fallthru
          _
      $region32: #{tpu_custom_call.1} parent=5 // pred_fallthru
        _
      %p1458 = scmp.le.s32.totalorder 2, %s13
      // Predicated region
      $region121: #{tpu_custom_call.1} parent=5 // pred_check
        %p1459 = pneg %p1458
      $region122: #{tpu_custom_call.1} parent=5 // pred_check_branch
        %1461 = sbr.rel (%p1459) target = $region124
      $region123: #{tpu_custom_call.1} parent=5 // pred_region
        %s1462 = ssub.s32 %s13, 2
        // Predicated region
        $region125: #{tpu_custom_call.1} parent=123 // pred_check
          %p1463 = pneg %p128
        $region126: #{tpu_custom_call.1} parent=123 // pred_check_branch
          %1465 = sbr.rel (%p1463) target = $region128
        $region127: #{tpu_custom_call.1} parent=123 // pred_region
          %s1466 = sand.u32 %s113, 1
          %s1467 = scalar_lea.sflag [#allocation9], %s1466
          %s1468 = sand.u32 %s113, 1
          %s1469 = smul.addr %s1468, 12
          %s1470 = scalar_lea.vmem [#allocation8], %s1469
          %1471 = dma.done %s1467, 192
        $region128: #{tpu_custom_call.1} parent=123 // pred_fallthru
          _
      $region124: #{tpu_custom_call.1} parent=5 // pred_fallthru
        _
    $region6: #{tpu_custom_call.1} parent=1 // loop_footer
      %s17 = sadd.s32 1, %s13
    $region7: #{tpu_custom_call.1} parent=1 // loop_footer_branch
      %12 = sbr.rel target = $region3
    $region8: #{tpu_custom_call.1} parent=1 // loop_exit
      _
    %1472 = vsyncpa [#allocation9], 1
    %s1473 = scalar_lea.sflag [#allocation9], 1
    %1474 = vsyncpa %s1473, 1
  %1475 = vsyncmov [#allocation3]
  %s1476 = vpop.sfrf %1475
  %p1477 = scmp.eq.s32.totalorder %s1476, 0
  %p1478 = pneg %p1477
  %1480 = shalt.err (%p1478)
  %s1481 = scalar_lea.sflag [#allocation3], 1
  %1482 = vsyncmov %s1481
  %s1483 = vpop.sfrf %1482
  %p1484 = scmp.eq.s32.totalorder %s1483, 0
  %p1485 = pneg %p1484
  %1487 = shalt.err (%p1485)

</llo_original>
